<compile_context>
chip_gen: v7x
topology: tpu7x:2x2x1
jax: 0.10.0
libtpu: 0.0.40
codegen_flags: <defaults>
</compile_context>

<pallas_src>
import functools

import jax
import jax.numpy as jnp
from jax.experimental import pallas as pl
from jax.experimental.pallas import tpu as pltpu


# ----------------------------------------------------------------------------
# Host-side (XLA) helpers: repack the tiny conv weights into lane-dense matmul
# operands.  Parameter-sized (KB), traced once under jit.
# ----------------------------------------------------------------------------
def _band_matrices(w, W):
    """3x3 conv weights (kh, kw, Cin, Cout) -> (kh, W*Cin, W*Cout) banded mats.

    M[dy, w_in*Cin + ci, w_out*Cout + co] = w[dy, w_in - w_out + 1, ci, co]
    when |w_in - w_out| <= 1, else 0 (encodes the dx taps and the width-wise
    zero padding).
    """
    kh, kw, cin, cout = w.shape
    wi = jnp.arange(W)[:, None]                 # w_in
    wo = jnp.arange(W)[None, :]                 # w_out
    dx = wi - wo + 1                            # (W, W)
    valid = ((dx >= 0) & (dx < kw)).astype(w.dtype)
    dxc = jnp.clip(dx, 0, kw - 1)
    blocks = w[:, dxc] * valid[None, :, :, None, None]   # (kh, Win, Wout, ci, co)
    return blocks.transpose(0, 1, 3, 2, 4).reshape(kh, W * cin, W * cout)


def _blockdiag_1x1(w1x1, W):
    """1x1 conv weights (Cin, Cout) -> block-diagonal (W*Cin, W*Cout)."""
    cin, cout = w1x1.shape
    eye = jnp.eye(W, dtype=w1x1.dtype)
    return jnp.einsum("ab,ij->aibj", eye, w1x1).reshape(W * cin, W * cout)


# ----------------------------------------------------------------------------
# Kernel A: both conv chains (x/y branches of BB batch elements stacked along
# the matmul M axis) + |diff| + 1x1 conv + lane-dense BN partial sums.
# ----------------------------------------------------------------------------
def _fused_chain_kernel(x_ref, y_ref, m1_ref, b1_ref, m2_ref, b2_ref,
                        m3_ref, b3_ref, mo_ref,
                        z_ref, sum_ref, sq_ref, pad_ref, *, H, BB):
    period = H + 1                 # image rows + one shared zero separator row
    n_img = 2 * BB                 # x images in slots [0,BB), y in [BB,2*BB)
    R = n_img * period - 1         # M dim of every per-tap stacked matmul

    # Zero the padded scratch once per step: separator/halo rows must be zero;
    # image rows are overwritten below before their first use.
    pad_ref[...] = jnp.zeros_like(pad_ref)

    def store_images(stacked_f32):
        # Write the (R, W*Cin) stacked activation back into the padded scratch
        # image-by-image (junk/separator rows are skipped, halo stays zero).
        for j in range(n_img):
            r0 = j * period
            pad_ref[r0 + 1:r0 + 1 + H, :] = stacked_f32[r0:r0 + H, :]

    def conv3x3(m_ref, b_ref):
        # 3x3 conv + bias + ReLU over the WHOLE stack: 3 bf16 MXU matmuls
        # (one per dy tap), f32 accumulate, f32 VPU epilogue.
        lhs0 = pad_ref[0:R, :].astype(jnp.bfloat16)
        lhs1 = pad_ref[1:R + 1, :].astype(jnp.bfloat16)
        lhs2 = pad_ref[2:R + 2, :].astype(jnp.bfloat16)
        acc = jnp.dot(lhs0, m_ref[0], preferred_element_type=jnp.float32)
        acc = acc + jnp.dot(lhs1, m_ref[1], preferred_element_type=jnp.float32)
        acc = acc + jnp.dot(lhs2, m_ref[2], preferred_element_type=jnp.float32)
        return jnp.maximum(acc + b_ref[...], 0.0)        # (R, W*Cin) f32

    # Initial fill from the input blocks.
    for b in range(BB):
        rx = b * period
        ry = (BB + b) * period
        pad_ref[rx + 1:rx + 1 + H, :] = x_ref[b]
        pad_ref[ry + 1:ry + 1 + H, :] = y_ref[b]

    a1 = conv3x3(m1_ref, b1_ref)          # stacked (x1 | y1)
    store_images(a1)
    a2 = conv3x3(m2_ref, b2_ref)          # stacked (x2 | y2)
    store_images(a2 + a1)
    a3 = conv3x3(m3_ref, b3_ref)          # stacked (x3 | y3)

    s = a1 + a2 + a3                      # (R, W*Cin) f32, junk rows harmless
    half = BB * period - 1
    d = jnp.abs(s[0:half, :] - s[BB * period:BB * period + half, :])

    # 1x1 conv as one block-diagonal bf16 matmul (bias dropped: absorbed by
    # the batch-statistics BatchNorm that follows).
    zfull = jnp.dot(d.astype(jnp.bfloat16), mo_ref[...],
                    preferred_element_type=jnp.float32)   # (half, W*Cout)

    wc_out = zfull.shape[-1]
    colsum = jnp.zeros((1, wc_out), jnp.float32)
    colsq = jnp.zeros((1, wc_out), jnp.float32)
    for b in range(BB):
        r0 = b * period
        zb = zfull[r0:r0 + H, :]                          # real rows only
        z_ref[b] = zb.astype(z_ref.dtype)
        colsum = colsum + jnp.sum(zb, axis=0, keepdims=True)
        colsq = colsq + jnp.sum(zb * zb, axis=0, keepdims=True)
    # Lane-dense (1, W*Cout) partials -> full-lane unmasked stores.
    # TODO(synk): E[z^2]-E[z]^2 can cancel if activations get a large mean;
    # a centered second pass would be needed for extreme ranges.
    sum_ref[0] = colsum
    sq_ref[0] = colsq


# ----------------------------------------------------------------------------
# Kernel B: BatchNorm (precomputed lane-dense scale/shift) + ReLU.
# Pure memory-bound FMA+ReLU, aliased in place onto z.
# ----------------------------------------------------------------------------
def _bn_relu_kernel(z_ref, scale_ref, shift_ref, o_ref):
    o_ref[...] = jnp.maximum(
        z_ref[...] * scale_ref[...] + shift_ref[...], 0.0).astype(o_ref.dtype)


# ----------------------------------------------------------------------------
# Parameters + forward.
# ----------------------------------------------------------------------------
def init_params(key, in_chn, out_chn):
    ks = jax.random.split(key, 8)

    def conv_w(k, kh, kw, ci, co):
        fan_in = kh * kw * ci
        return (jax.random.normal(k, (kh, kw, ci, co), jnp.float32)
                * (2.0 / fan_in) ** 0.5)

    return {
        "w1": conv_w(ks[0], 3, 3, in_chn, in_chn),
        "b1": 0.01 * jax.random.normal(ks[1], (1, in_chn), jnp.float32),
        "w2": conv_w(ks[2], 3, 3, in_chn, in_chn),
        "b2": 0.01 * jax.random.normal(ks[3], (1, in_chn), jnp.float32),
        "w3": conv_w(ks[4], 3, 3, in_chn, in_chn),
        "b3": 0.01 * jax.random.normal(ks[5], (1, in_chn), jnp.float32),
        "w_out": conv_w(ks[6], 1, 1, in_chn, out_chn)[0, 0],   # (Cin, Cout)
        # b_out is kept for interface parity but is a mathematical no-op under
        # training-mode batch-stat BN (absorbed by the BN shift).
        "b_out": 0.01 * jax.random.normal(ks[7], (1, out_chn), jnp.float32),
        "gamma": jnp.ones((1, out_chn), jnp.float32),
        "beta": jnp.zeros((1, out_chn), jnp.float32),
    }


def _pick_batch_block(n, target=4):
    """Largest BB<=target dividing n while keeping >=2 grid steps (v7x 2 TCs)."""
    bb = 1
    for cand in range(1, min(n, target) + 1):
        if n % cand == 0 and (n // cand) >= 2:
            bb = cand
    return bb


def _pick_row_tile(rows, cap=1024):
    """Row tile for the mem-bound BN+ReLU pass (large, multiple of 8)."""
    if rows <= cap:
        return rows
    for cand in range(cap, 7, -1):
        if rows % cand == 0 and cand % 8 == 0:
            return cand
    return rows


def _vmem_limit(est_bytes):
    return int(min(max(2 * est_bytes, 32 * 1024 * 1024), 100 * 1024 * 1024))


@jax.jit
def densecat_cat_diff_forward(params, x_nchw, y_nchw, eps=1e-5):
    N, Cin, H, W = x_nchw.shape
    Cout = params["w_out"].shape[-1]
    WC_in, WC_out = W * Cin, W * Cout

    # NCHW -> lane-dense 2-D rows (N, H, W*C).  Boundary glue, not hot path.
    x2d = jnp.transpose(x_nchw, (0, 2, 3, 1)).reshape(N, H, WC_in).astype(jnp.float32)
    y2d = jnp.transpose(y_nchw, (0, 2, 3, 1)).reshape(N, H, WC_in).astype(jnp.float32)

    # Repack tiny conv weights into lane-dense bf16 MXU operands (host/XLA).
    m1 = _band_matrices(params["w1"], W).astype(jnp.bfloat16)
    m2 = _band_matrices(params["w2"], W).astype(jnp.bfloat16)
    m3 = _band_matrices(params["w3"], W).astype(jnp.bfloat16)
    b1l = jnp.tile(params["b1"], (1, W)).astype(jnp.float32)   # (1, W*Cin)
    b2l = jnp.tile(params["b2"], (1, W)).astype(jnp.float32)
    b3l = jnp.tile(params["b3"], (1, W)).astype(jnp.float32)
    mo = _blockdiag_1x1(params["w_out"], W).astype(jnp.bfloat16)   # (W*Cin, W*Cout)

    BB = _pick_batch_block(N)
    G = N // BB
    pad_rows = 2 * BB * (H + 1) + 1

    est_a = (2 * (2 * BB * H * WC_in * 4            # x, y blocks (dbl-buffered)
                  + 3 * (3 * WC_in * WC_in * 2)     # m1, m2, m3 (bf16)
                  + 3 * WC_in * 4                   # biases
                  + WC_in * WC_out * 2              # mo (bf16)
                  + BB * H * WC_out * 4             # z block
                  + 2 * WC_out * 4)                 # partial sums
             + pad_rows * WC_in * 4                 # padded scratch
             + 8 * pad_rows * max(WC_in, WC_out) * 4)   # stacked intermediates
    cparams_a = pltpu.CompilerParams(dimension_semantics=("parallel",),
                                     vmem_limit_bytes=_vmem_limit(est_a))

    kern_a = functools.partial(_fused_chain_kernel, H=H, BB=BB)
    z, sums, sqs = pl.pallas_call(
        kern_a,
        out_shape=(
            jax.ShapeDtypeStruct((N, H, WC_out), jnp.float32),
            jax.ShapeDtypeStruct((G, 1, WC_out), jnp.float32),
            jax.ShapeDtypeStruct((G, 1, WC_out), jnp.float32),
        ),
        grid=(G,),
        in_specs=[
            pl.BlockSpec((BB, H, WC_in), lambda g: (g, 0, 0)),       # x
            pl.BlockSpec((BB, H, WC_in), lambda g: (g, 0, 0)),       # y
            pl.BlockSpec((3, WC_in, WC_in), lambda g: (0, 0, 0)),    # m1
            pl.BlockSpec((1, WC_in), lambda g: (0, 0)),              # b1
            pl.BlockSpec((3, WC_in, WC_in), lambda g: (0, 0, 0)),    # m2
            pl.BlockSpec((1, WC_in), lambda g: (0, 0)),              # b2
            pl.BlockSpec((3, WC_in, WC_in), lambda g: (0, 0, 0)),    # m3
            pl.BlockSpec((1, WC_in), lambda g: (0, 0)),              # b3
            pl.BlockSpec((WC_in, WC_out), lambda g: (0, 0)),         # mo
        ],
        out_specs=(
            pl.BlockSpec((BB, H, WC_out), lambda g: (g, 0, 0)),      # z
            pl.BlockSpec((1, 1, WC_out), lambda g: (g, 0, 0)),       # col sums
            pl.BlockSpec((1, 1, WC_out), lambda g: (g, 0, 0)),       # col sumsq
        ),
        scratch_shapes=[pltpu.VMEM((pad_rows, WC_in), jnp.float32)],
        compiler_params=cparams_a,
    )(x2d, y2d, m1, b1l, m2, b2l, m3, b3l, mo)

    # Tiny host-side BN statistics (training-mode batch stats, biased var),
    # computed once, expanded once to the lane-dense (w, c) layout.
    count = float(N * H * W)
    lane_sum = jnp.sum(sums, axis=(0, 1))                   # (W*Cout,)
    lane_sq = jnp.sum(sqs, axis=(0, 1))
    ch_sum = lane_sum.reshape(W, Cout).sum(axis=0)          # (Cout,)
    ch_sq = lane_sq.reshape(W, Cout).sum(axis=0)
    mean = ch_sum / count
    var = jnp.maximum(ch_sq / count - mean * mean, 0.0)
    inv = jax.lax.rsqrt(var + eps)
    scale_c = params["gamma"][0] * inv
    shift_c = params["beta"][0] - mean * scale_c
    scale_l = jnp.tile(scale_c, (W,)).reshape(1, WC_out)    # lane order (w, c)
    shift_l = jnp.tile(shift_c, (W,)).reshape(1, WC_out)

    rows = N * H
    TR = _pick_row_tile(rows)
    z_flat = z.reshape(rows, WC_out)
    est_b = 2 * (2 * TR * WC_out * 4 + 2 * WC_out * 4)
    cparams_b = pltpu.CompilerParams(dimension_semantics=("parallel",),
                                     vmem_limit_bytes=_vmem_limit(est_b))

    out_flat = pl.pallas_call(
        _bn_relu_kernel,
        out_shape=jax.ShapeDtypeStruct((rows, WC_out), jnp.float32),
        grid=(rows // TR,),
        in_specs=[
            pl.BlockSpec((TR, WC_out), lambda r: (r, 0)),            # z rows
            pl.BlockSpec((1, WC_out), lambda r: (0, 0)),             # scale
            pl.BlockSpec((1, WC_out), lambda r: (0, 0)),             # shift
        ],
        out_specs=pl.BlockSpec((TR, WC_out), lambda r: (r, 0)),
        input_output_aliases={0: 0},          # overwrite z in place (no extra HBM)
        compiler_params=cparams_b,
    )(z_flat, scale_l, shift_l)

    # (N*H, W*Cout) -> NCHW to match the PyTorch module's output convention.
    out = out_flat.reshape(N, H, W, Cout).astype(x_nchw.dtype)
    return jnp.transpose(out, (0, 3, 1, 2))


if __name__ == "__main__":
    in_chn, out_chn = 4, 8
    N, H, W = 2, 16, 16

    key = jax.random.PRNGKey(0)
    kp, kx, ky = jax.random.split(key, 3)
    params = init_params(kp, in_chn, out_chn)
    x = jax.random.normal(kx, (N, in_chn, H, W), jnp.float32)
    y = jax.random.normal(ky, (N, in_chn, H, W), jnp.float32)

    out = densecat_cat_diff_forward(params, x, y)
    jax.block_until_ready(out)
    assert out.shape == (N, out_chn, H, W)
    print("KERNEL_OK")
</pallas_src>

<mosaic_0001>
module attributes {stable_mosaic.version = 11 : i64} {
  func.func @_fused_chain_kernel(%arg0: i32, %arg1: memref<1x16x64xf32, #tpu.memory_space<vmem>>, %arg2: memref<1x16x64xf32, #tpu.memory_space<vmem>>, %arg3: memref<3x64x64xbf16, #tpu.memory_space<vmem>>, %arg4: memref<1x64xf32, #tpu.memory_space<vmem>>, %arg5: memref<3x64x64xbf16, #tpu.memory_space<vmem>>, %arg6: memref<1x64xf32, #tpu.memory_space<vmem>>, %arg7: memref<3x64x64xbf16, #tpu.memory_space<vmem>>, %arg8: memref<1x64xf32, #tpu.memory_space<vmem>>, %arg9: memref<64x128xbf16, #tpu.memory_space<vmem>>, %arg10: memref<1x16x128xf32, #tpu.memory_space<vmem>>, %arg11: memref<1x1x128xf32, #tpu.memory_space<vmem>>, %arg12: memref<1x1x128xf32, #tpu.memory_space<vmem>>, %arg13: memref<35x64xf32, #tpu.memory_space<vmem>>) attributes {dimension_semantics = [#tpu.dimension_semantics<parallel>], iteration_bounds = array<i64: 2>, scalar_prefetch = 0 : i64, scratch_operands = 1 : i64, tpu.core_type = #tpu.core_type<tc>, window_params = [{transform_indices = @transform_0, window_bounds = array<i64: 1, 16, 64>}, {transform_indices = @transform_1, window_bounds = array<i64: 1, 16, 64>}, {pipeline_mode = #tpu.pipeline_mode<synchronous>, transform_indices = @transform_2, window_bounds = array<i64: 3, 64, 64>}, {pipeline_mode = #tpu.pipeline_mode<synchronous>, transform_indices = @transform_3, window_bounds = array<i64: 1, 64>}, {pipeline_mode = #tpu.pipeline_mode<synchronous>, transform_indices = @transform_4, window_bounds = array<i64: 3, 64, 64>}, {pipeline_mode = #tpu.pipeline_mode<synchronous>, transform_indices = @transform_5, window_bounds = array<i64: 1, 64>}, {pipeline_mode = #tpu.pipeline_mode<synchronous>, transform_indices = @transform_6, window_bounds = array<i64: 3, 64, 64>}, {pipeline_mode = #tpu.pipeline_mode<synchronous>, transform_indices = @transform_7, window_bounds = array<i64: 1, 64>}, {pipeline_mode = #tpu.pipeline_mode<synchronous>, transform_indices = @transform_8, window_bounds = array<i64: 64, 128>}, {transform_indices = @transform_9, window_bounds = array<i64: 1, 16, 128>}, {transform_indices = @transform_10, window_bounds = array<i64: 1, 1, 128>}, {transform_indices = @transform_11, window_bounds = array<i64: 1, 1, 128>}]} {
    %cst = arith.constant 0.000000e+00 : f32
    %0 = vector.broadcast %cst : f32 to vector<35x64xf32>
    %c0 = arith.constant 0 : index
    %c0_0 = arith.constant 0 : index
    %1 = vector.load %arg13[%c0, %c0_0] : memref<35x64xf32, #tpu.memory_space<vmem>>, vector<35x64xf32>
    tpu.vector_store %arg13[%c0, %c0_0], %0 {strides = array<i32>} : memref<35x64xf32, #tpu.memory_space<vmem>>, vector<35x64xf32>,
    %c0_1 = arith.constant 0 : index
    %c0_2 = arith.constant 0 : index
    %c0_3 = arith.constant 0 : index
    %2 = vector.load %arg1[%c0_1, %c0_2, %c0_3] : memref<1x16x64xf32, #tpu.memory_space<vmem>>, vector<1x16x64xf32>
    %3 = vector.shape_cast %2 : vector<1x16x64xf32> to vector<16x64xf32>
    %c1 = arith.constant 1 : index
    %c0_4 = arith.constant 0 : index
    %4 = vector.load %arg13[%c1, %c0_4] : memref<35x64xf32, #tpu.memory_space<vmem>>, vector<16x64xf32>
    tpu.vector_store %arg13[%c1, %c0_4], %3 {strides = array<i32>} : memref<35x64xf32, #tpu.memory_space<vmem>>, vector<16x64xf32>,
    %c0_5 = arith.constant 0 : index
    %c0_6 = arith.constant 0 : index
    %c0_7 = arith.constant 0 : index
    %5 = vector.load %arg2[%c0_5, %c0_6, %c0_7] : memref<1x16x64xf32, #tpu.memory_space<vmem>>, vector<1x16x64xf32>
    %6 = vector.shape_cast %5 : vector<1x16x64xf32> to vector<16x64xf32>
    %c18 = arith.constant 18 : index
    %c0_8 = arith.constant 0 : index
    %7 = vector.load %arg13[%c18, %c0_8] : memref<35x64xf32, #tpu.memory_space<vmem>>, vector<16x64xf32>
    tpu.vector_store %arg13[%c18, %c0_8], %6 {strides = array<i32>} : memref<35x64xf32, #tpu.memory_space<vmem>>, vector<16x64xf32>,
    %c0_9 = arith.constant 0 : index
    %c0_10 = arith.constant 0 : index
    %8 = vector.load %arg13[%c0_9, %c0_10] : memref<35x64xf32, #tpu.memory_space<vmem>>, vector<33x64xf32>
    %9 = arith.truncf %8 : vector<33x64xf32> to vector<33x64xbf16>
    %c1_11 = arith.constant 1 : index
    %c0_12 = arith.constant 0 : index
    %10 = vector.load %arg13[%c1_11, %c0_12] : memref<35x64xf32, #tpu.memory_space<vmem>>, vector<33x64xf32>
    %11 = arith.truncf %10 : vector<33x64xf32> to vector<33x64xbf16>
    %c2 = arith.constant 2 : index
    %c0_13 = arith.constant 0 : index
    %12 = vector.load %arg13[%c2, %c0_13] : memref<35x64xf32, #tpu.memory_space<vmem>>, vector<33x64xf32>
    %13 = arith.truncf %12 : vector<33x64xf32> to vector<33x64xbf16>
    %c0_14 = arith.constant 0 : index
    %c0_15 = arith.constant 0 : index
    %c0_16 = arith.constant 0 : index
    %14 = vector.load %arg3[%c0_14, %c0_15, %c0_16] : memref<3x64x64xbf16, #tpu.memory_space<vmem>>, vector<1x64x64xbf16>
    %15 = vector.shape_cast %14 : vector<1x64x64xbf16> to vector<64x64xbf16>
    %cst_17 = arith.constant dense<0.000000e+00> : vector<33x64xf32>
    %16 = tpu.matmul %9, %15, %cst_17 {dimension_numbers = #tpu.dot_dimension_numbers<[1], [0], [0], [1], [0, 0, 1, 1], [], []>} : vector<33x64xbf16>, vector<64x64xbf16>, vector<33x64xf32> -> vector<33x64xf32>
    %c1_18 = arith.constant 1 : index
    %c0_19 = arith.constant 0 : index
    %c0_20 = arith.constant 0 : index
    %17 = vector.load %arg3[%c1_18, %c0_19, %c0_20] : memref<3x64x64xbf16, #tpu.memory_space<vmem>>, vector<1x64x64xbf16>
    %18 = vector.shape_cast %17 : vector<1x64x64xbf16> to vector<64x64xbf16>
    %cst_21 = arith.constant dense<0.000000e+00> : vector<33x64xf32>
    %19 = tpu.matmul %11, %18, %cst_21 {dimension_numbers = #tpu.dot_dimension_numbers<[1], [0], [0], [1], [0, 0, 1, 1], [], []>} : vector<33x64xbf16>, vector<64x64xbf16>, vector<33x64xf32> -> vector<33x64xf32>
    %20 = arith.addf %16, %19 : vector<33x64xf32>
    %c2_22 = arith.constant 2 : index
    %c0_23 = arith.constant 0 : index
    %c0_24 = arith.constant 0 : index
    %21 = vector.load %arg3[%c2_22, %c0_23, %c0_24] : memref<3x64x64xbf16, #tpu.memory_space<vmem>>, vector<1x64x64xbf16>
    %22 = vector.shape_cast %21 : vector<1x64x64xbf16> to vector<64x64xbf16>
    %cst_25 = arith.constant dense<0.000000e+00> : vector<33x64xf32>
    %23 = tpu.matmul %13, %22, %cst_25 {dimension_numbers = #tpu.dot_dimension_numbers<[1], [0], [0], [1], [0, 0, 1, 1], [], []>} : vector<33x64xbf16>, vector<64x64xbf16>, vector<33x64xf32> -> vector<33x64xf32>
    %24 = arith.addf %20, %23 : vector<33x64xf32>
    %c0_26 = arith.constant 0 : index
    %c0_27 = arith.constant 0 : index
    %25 = vector.load %arg4[%c0_26, %c0_27] : memref<1x64xf32, #tpu.memory_space<vmem>>, vector<1x64xf32>
    %26 = vector.broadcast %25 : vector<1x64xf32> to vector<33x64xf32>
    %27 = arith.addf %24, %26 : vector<33x64xf32>
    %cst_28 = arith.constant 0.000000e+00 : f32
    %28 = vector.broadcast %cst_28 : f32 to vector<33x64xf32>
    %29 = arith.maximumf %27, %28 : vector<33x64xf32>
    %30 = vector.extract_strided_slice %29 {offsets = [0, 0], sizes = [16, 64], strides = [1, 1]} : vector<33x64xf32> to vector<16x64xf32>
    %c1_29 = arith.constant 1 : index
    %c0_30 = arith.constant 0 : index
    %31 = vector.load %arg13[%c1_29, %c0_30] : memref<35x64xf32, #tpu.memory_space<vmem>>, vector<16x64xf32>
    tpu.vector_store %arg13[%c1_29, %c0_30], %30 {strides = array<i32>} : memref<35x64xf32, #tpu.memory_space<vmem>>, vector<16x64xf32>,
    %32 = vector.extract_strided_slice %29 {offsets = [17, 0], sizes = [16, 64], strides = [1, 1]} : vector<33x64xf32> to vector<16x64xf32>
    %c18_31 = arith.constant 18 : index
    %c0_32 = arith.constant 0 : index
    %33 = vector.load %arg13[%c18_31, %c0_32] : memref<35x64xf32, #tpu.memory_space<vmem>>, vector<16x64xf32>
    tpu.vector_store %arg13[%c18_31, %c0_32], %32 {strides = array<i32>} : memref<35x64xf32, #tpu.memory_space<vmem>>, vector<16x64xf32>,
    %c0_33 = arith.constant 0 : index
    %c0_34 = arith.constant 0 : index
    %34 = vector.load %arg13[%c0_33, %c0_34] : memref<35x64xf32, #tpu.memory_space<vmem>>, vector<33x64xf32>
    %35 = arith.truncf %34 : vector<33x64xf32> to vector<33x64xbf16>
    %c1_35 = arith.constant 1 : index
    %c0_36 = arith.constant 0 : index
    %36 = vector.load %arg13[%c1_35, %c0_36] : memref<35x64xf32, #tpu.memory_space<vmem>>, vector<33x64xf32>
    %37 = arith.truncf %36 : vector<33x64xf32> to vector<33x64xbf16>
    %c2_37 = arith.constant 2 : index
    %c0_38 = arith.constant 0 : index
    %38 = vector.load %arg13[%c2_37, %c0_38] : memref<35x64xf32, #tpu.memory_space<vmem>>, vector<33x64xf32>
    %39 = arith.truncf %38 : vector<33x64xf32> to vector<33x64xbf16>
    %c0_39 = arith.constant 0 : index
    %c0_40 = arith.constant 0 : index
    %c0_41 = arith.constant 0 : index
    %40 = vector.load %arg5[%c0_39, %c0_40, %c0_41] : memref<3x64x64xbf16, #tpu.memory_space<vmem>>, vector<1x64x64xbf16>
    %41 = vector.shape_cast %40 : vector<1x64x64xbf16> to vector<64x64xbf16>
    %cst_42 = arith.constant dense<0.000000e+00> : vector<33x64xf32>
    %42 = tpu.matmul %35, %41, %cst_42 {dimension_numbers = #tpu.dot_dimension_numbers<[1], [0], [0], [1], [0, 0, 1, 1], [], []>} : vector<33x64xbf16>, vector<64x64xbf16>, vector<33x64xf32> -> vector<33x64xf32>
    %c1_43 = arith.constant 1 : index
    %c0_44 = arith.constant 0 : index
    %c0_45 = arith.constant 0 : index
    %43 = vector.load %arg5[%c1_43, %c0_44, %c0_45] : memref<3x64x64xbf16, #tpu.memory_space<vmem>>, vector<1x64x64xbf16>
    %44 = vector.shape_cast %43 : vector<1x64x64xbf16> to vector<64x64xbf16>
    %cst_46 = arith.constant dense<0.000000e+00> : vector<33x64xf32>
    %45 = tpu.matmul %37, %44, %cst_46 {dimension_numbers = #tpu.dot_dimension_numbers<[1], [0], [0], [1], [0, 0, 1, 1], [], []>} : vector<33x64xbf16>, vector<64x64xbf16>, vector<33x64xf32> -> vector<33x64xf32>
    %46 = arith.addf %42, %45 : vector<33x64xf32>
    %c2_47 = arith.constant 2 : index
    %c0_48 = arith.constant 0 : index
    %c0_49 = arith.constant 0 : index
    %47 = vector.load %arg5[%c2_47, %c0_48, %c0_49] : memref<3x64x64xbf16, #tpu.memory_space<vmem>>, vector<1x64x64xbf16>
    %48 = vector.shape_cast %47 : vector<1x64x64xbf16> to vector<64x64xbf16>
    %cst_50 = arith.constant dense<0.000000e+00> : vector<33x64xf32>
    %49 = tpu.matmul %39, %48, %cst_50 {dimension_numbers = #tpu.dot_dimension_numbers<[1], [0], [0], [1], [0, 0, 1, 1], [], []>} : vector<33x64xbf16>, vector<64x64xbf16>, vector<33x64xf32> -> vector<33x64xf32>
    %50 = arith.addf %46, %49 : vector<33x64xf32>
    %c0_51 = arith.constant 0 : index
    %c0_52 = arith.constant 0 : index
    %51 = vector.load %arg6[%c0_51, %c0_52] : memref<1x64xf32, #tpu.memory_space<vmem>>, vector<1x64xf32>
    %52 = vector.broadcast %51 : vector<1x64xf32> to vector<33x64xf32>
    %53 = arith.addf %50, %52 : vector<33x64xf32>
    %cst_53 = arith.constant 0.000000e+00 : f32
    %54 = vector.broadcast %cst_53 : f32 to vector<33x64xf32>
    %55 = arith.maximumf %53, %54 : vector<33x64xf32>
    %56 = arith.addf %55, %29 : vector<33x64xf32>
    %57 = vector.extract_strided_slice %56 {offsets = [0, 0], sizes = [16, 64], strides = [1, 1]} : vector<33x64xf32> to vector<16x64xf32>
    %c1_54 = arith.constant 1 : index
    %c0_55 = arith.constant 0 : index
    %58 = vector.load %arg13[%c1_54, %c0_55] : memref<35x64xf32, #tpu.memory_space<vmem>>, vector<16x64xf32>
    tpu.vector_store %arg13[%c1_54, %c0_55], %57 {strides = array<i32>} : memref<35x64xf32, #tpu.memory_space<vmem>>, vector<16x64xf32>,
    %59 = vector.extract_strided_slice %56 {offsets = [17, 0], sizes = [16, 64], strides = [1, 1]} : vector<33x64xf32> to vector<16x64xf32>
    %c18_56 = arith.constant 18 : index
    %c0_57 = arith.constant 0 : index
    %60 = vector.load %arg13[%c18_56, %c0_57] : memref<35x64xf32, #tpu.memory_space<vmem>>, vector<16x64xf32>
    tpu.vector_store %arg13[%c18_56, %c0_57], %59 {strides = array<i32>} : memref<35x64xf32, #tpu.memory_space<vmem>>, vector<16x64xf32>,
    %c0_58 = arith.constant 0 : index
    %c0_59 = arith.constant 0 : index
    %61 = vector.load %arg13[%c0_58, %c0_59] : memref<35x64xf32, #tpu.memory_space<vmem>>, vector<33x64xf32>
    %62 = arith.truncf %61 : vector<33x64xf32> to vector<33x64xbf16>
    %c1_60 = arith.constant 1 : index
    %c0_61 = arith.constant 0 : index
    %63 = vector.load %arg13[%c1_60, %c0_61] : memref<35x64xf32, #tpu.memory_space<vmem>>, vector<33x64xf32>
    %64 = arith.truncf %63 : vector<33x64xf32> to vector<33x64xbf16>
    %c2_62 = arith.constant 2 : index
    %c0_63 = arith.constant 0 : index
    %65 = vector.load %arg13[%c2_62, %c0_63] : memref<35x64xf32, #tpu.memory_space<vmem>>, vector<33x64xf32>
    %66 = arith.truncf %65 : vector<33x64xf32> to vector<33x64xbf16>
    %c0_64 = arith.constant 0 : index
    %c0_65 = arith.constant 0 : index
    %c0_66 = arith.constant 0 : index
    %67 = vector.load %arg7[%c0_64, %c0_65, %c0_66] : memref<3x64x64xbf16, #tpu.memory_space<vmem>>, vector<1x64x64xbf16>
    %68 = vector.shape_cast %67 : vector<1x64x64xbf16> to vector<64x64xbf16>
    %cst_67 = arith.constant dense<0.000000e+00> : vector<33x64xf32>
    %69 = tpu.matmul %62, %68, %cst_67 {dimension_numbers = #tpu.dot_dimension_numbers<[1], [0], [0], [1], [0, 0, 1, 1], [], []>} : vector<33x64xbf16>, vector<64x64xbf16>, vector<33x64xf32> -> vector<33x64xf32>
    %c1_68 = arith.constant 1 : index
    %c0_69 = arith.constant 0 : index
    %c0_70 = arith.constant 0 : index
    %70 = vector.load %arg7[%c1_68, %c0_69, %c0_70] : memref<3x64x64xbf16, #tpu.memory_space<vmem>>, vector<1x64x64xbf16>
    %71 = vector.shape_cast %70 : vector<1x64x64xbf16> to vector<64x64xbf16>
    %cst_71 = arith.constant dense<0.000000e+00> : vector<33x64xf32>
    %72 = tpu.matmul %64, %71, %cst_71 {dimension_numbers = #tpu.dot_dimension_numbers<[1], [0], [0], [1], [0, 0, 1, 1], [], []>} : vector<33x64xbf16>, vector<64x64xbf16>, vector<33x64xf32> -> vector<33x64xf32>
    %73 = arith.addf %69, %72 : vector<33x64xf32>
    %c2_72 = arith.constant 2 : index
    %c0_73 = arith.constant 0 : index
    %c0_74 = arith.constant 0 : index
    %74 = vector.load %arg7[%c2_72, %c0_73, %c0_74] : memref<3x64x64xbf16, #tpu.memory_space<vmem>>, vector<1x64x64xbf16>
    %75 = vector.shape_cast %74 : vector<1x64x64xbf16> to vector<64x64xbf16>
    %cst_75 = arith.constant dense<0.000000e+00> : vector<33x64xf32>
    %76 = tpu.matmul %66, %75, %cst_75 {dimension_numbers = #tpu.dot_dimension_numbers<[1], [0], [0], [1], [0, 0, 1, 1], [], []>} : vector<33x64xbf16>, vector<64x64xbf16>, vector<33x64xf32> -> vector<33x64xf32>
    %77 = arith.addf %73, %76 : vector<33x64xf32>
    %c0_76 = arith.constant 0 : index
    %c0_77 = arith.constant 0 : index
    %78 = vector.load %arg8[%c0_76, %c0_77] : memref<1x64xf32, #tpu.memory_space<vmem>>, vector<1x64xf32>
    %79 = vector.broadcast %78 : vector<1x64xf32> to vector<33x64xf32>
    %80 = arith.addf %77, %79 : vector<33x64xf32>
    %cst_78 = arith.constant 0.000000e+00 : f32
    %81 = vector.broadcast %cst_78 : f32 to vector<33x64xf32>
    %82 = arith.maximumf %80, %81 : vector<33x64xf32>
    %83 = arith.addf %29, %55 : vector<33x64xf32>
    %84 = arith.addf %83, %82 : vector<33x64xf32>
    %85 = vector.extract_strided_slice %84 {offsets = [0, 0], sizes = [16, 64], strides = [1, 1]} : vector<33x64xf32> to vector<16x64xf32>
    %86 = vector.extract_strided_slice %84 {offsets = [17, 0], sizes = [16, 64], strides = [1, 1]} : vector<33x64xf32> to vector<16x64xf32>
    %87 = arith.subf %85, %86 : vector<16x64xf32>
    %88 = math.absf %87 : vector<16x64xf32>
    %89 = arith.truncf %88 : vector<16x64xf32> to vector<16x64xbf16>
    %c0_79 = arith.constant 0 : index
    %c0_80 = arith.constant 0 : index
    %90 = vector.load %arg9[%c0_79, %c0_80] : memref<64x128xbf16, #tpu.memory_space<vmem>>, vector<64x128xbf16>
    %cst_81 = arith.constant dense<0.000000e+00> : vector<16x128xf32>
    %91 = tpu.matmul %89, %90, %cst_81 {dimension_numbers = #tpu.dot_dimension_numbers<[1], [0], [0], [1], [0, 0, 1, 1], [], []>} : vector<16x64xbf16>, vector<64x128xbf16>, vector<16x128xf32> -> vector<16x128xf32>
    %cst_82 = arith.constant 0.000000e+00 : f32
    %92 = vector.broadcast %cst_82 : f32 to vector<1x128xf32>
    %cst_83 = arith.constant 0.000000e+00 : f32
    %93 = vector.broadcast %cst_83 : f32 to vector<1x128xf32>
    %c0_84 = arith.constant 0 : index
    %c0_85 = arith.constant 0 : index
    %c0_86 = arith.constant 0 : index
    %94 = vector.load %arg10[%c0_84, %c0_85, %c0_86] : memref<1x16x128xf32, #tpu.memory_space<vmem>>, vector<1x16x128xf32>
    %95 = vector.shape_cast %94 : vector<1x16x128xf32> to vector<16x128xf32>
    %96 = vector.shape_cast %91 : vector<16x128xf32> to vector<1x16x128xf32>
    tpu.vector_store %arg10[%c0_84, %c0_85, %c0_86], %96 {strides = array<i32>} : memref<1x16x128xf32, #tpu.memory_space<vmem>>, vector<1x16x128xf32>,
    %cst_87 = arith.constant dense<0.000000e+00> : vector<128xf32>
    %97 = vector.multi_reduction <add>, %91, %cst_87 [0] : vector<16x128xf32> to vector<128xf32>
    %98 = vector.shape_cast %97 : vector<128xf32> to vector<1x128xf32>
    %99 = arith.addf %92, %98 : vector<1x128xf32>
    %100 = arith.mulf %91, %91 : vector<16x128xf32>
    %cst_88 = arith.constant dense<0.000000e+00> : vector<128xf32>
    %101 = vector.multi_reduction <add>, %100, %cst_88 [0] : vector<16x128xf32> to vector<128xf32>
    %102 = vector.shape_cast %101 : vector<128xf32> to vector<1x128xf32>
    %103 = arith.addf %93, %102 : vector<1x128xf32>
    %c0_89 = arith.constant 0 : index
    %c0_90 = arith.constant 0 : index
    %c0_91 = arith.constant 0 : index
    %104 = vector.load %arg11[%c0_89, %c0_90, %c0_91] : memref<1x1x128xf32, #tpu.memory_space<vmem>>, vector<1x1x128xf32>
    %105 = vector.shape_cast %104 : vector<1x1x128xf32> to vector<1x128xf32>
    %106 = vector.shape_cast %99 : vector<1x128xf32> to vector<1x1x128xf32>
    tpu.vector_store %arg11[%c0_89, %c0_90, %c0_91], %106 {strides = array<i32>} : memref<1x1x128xf32, #tpu.memory_space<vmem>>, vector<1x1x128xf32>,
    %c0_92 = arith.constant 0 : index
    %c0_93 = arith.constant 0 : index
    %c0_94 = arith.constant 0 : index
    %107 = vector.load %arg12[%c0_92, %c0_93, %c0_94] : memref<1x1x128xf32, #tpu.memory_space<vmem>>, vector<1x1x128xf32>
    %108 = vector.shape_cast %107 : vector<1x1x128xf32> to vector<1x128xf32>
    %109 = vector.shape_cast %103 : vector<1x128xf32> to vector<1x1x128xf32>
    tpu.vector_store %arg12[%c0_92, %c0_93, %c0_94], %109 {strides = array<i32>} : memref<1x1x128xf32, #tpu.memory_space<vmem>>, vector<1x1x128xf32>,
    return
  }
  func.func @transform_0(%arg0: i32) -> (i32, i32, i32) {
    %c0_i32 = arith.constant 0 : i32
    %c0_i32_0 = arith.constant 0 : i32
    %c0_i32_1 = arith.constant 0 : i32
    return %arg0, %c0_i32, %c0_i32_0 : i32, i32, i32
  }
  func.func @transform_1(%arg0: i32) -> (i32, i32, i32) {
    %c0_i32 = arith.constant 0 : i32
    %c0_i32_0 = arith.constant 0 : i32
    %c0_i32_1 = arith.constant 0 : i32
    return %arg0, %c0_i32, %c0_i32_0 : i32, i32, i32
  }
  func.func @transform_2(%arg0: i32) -> (i32, i32, i32) {
    %c0_i32 = arith.constant 0 : i32
    %c0_i32_0 = arith.constant 0 : i32
    %c0_i32_1 = arith.constant 0 : i32
    %c0_i32_2 = arith.constant 0 : i32
    return %c0_i32, %c0_i32_0, %c0_i32_1 : i32, i32, i32
  }
  func.func @transform_3(%arg0: i32) -> (i32, i32) {
    %c0_i32 = arith.constant 0 : i32
    %c0_i32_0 = arith.constant 0 : i32
    %c0_i32_1 = arith.constant 0 : i32
    return %c0_i32, %c0_i32_0 : i32, i32
  }
  func.func @transform_4(%arg0: i32) -> (i32, i32, i32) {
    %c0_i32 = arith.constant 0 : i32
    %c0_i32_0 = arith.constant 0 : i32
    %c0_i32_1 = arith.constant 0 : i32
    %c0_i32_2 = arith.constant 0 : i32
    return %c0_i32, %c0_i32_0, %c0_i32_1 : i32, i32, i32
  }
  func.func @transform_5(%arg0: i32) -> (i32, i32) {
    %c0_i32 = arith.constant 0 : i32
    %c0_i32_0 = arith.constant 0 : i32
    %c0_i32_1 = arith.constant 0 : i32
    return %c0_i32, %c0_i32_0 : i32, i32
  }
  func.func @transform_6(%arg0: i32) -> (i32, i32, i32) {
    %c0_i32 = arith.constant 0 : i32
    %c0_i32_0 = arith.constant 0 : i32
    %c0_i32_1 = arith.constant 0 : i32
    %c0_i32_2 = arith.constant 0 : i32
    return %c0_i32, %c0_i32_0, %c0_i32_1 : i32, i32, i32
  }
  func.func @transform_7(%arg0: i32) -> (i32, i32) {
    %c0_i32 = arith.constant 0 : i32
    %c0_i32_0 = arith.constant 0 : i32
    %c0_i32_1 = arith.constant 0 : i32
    return %c0_i32, %c0_i32_0 : i32, i32
  }
  func.func @transform_8(%arg0: i32) -> (i32, i32) {
    %c0_i32 = arith.constant 0 : i32
    %c0_i32_0 = arith.constant 0 : i32
    %c0_i32_1 = arith.constant 0 : i32
    return %c0_i32, %c0_i32_0 : i32, i32
  }
  func.func @transform_9(%arg0: i32) -> (i32, i32, i32) {
    %c0_i32 = arith.constant 0 : i32
    %c0_i32_0 = arith.constant 0 : i32
    %c0_i32_1 = arith.constant 0 : i32
    return %arg0, %c0_i32, %c0_i32_0 : i32, i32, i32
  }
  func.func @transform_10(%arg0: i32) -> (i32, i32, i32) {
    %c0_i32 = arith.constant 0 : i32
    %c0_i32_0 = arith.constant 0 : i32
    %c0_i32_1 = arith.constant 0 : i32
    return %arg0, %c0_i32, %c0_i32_0 : i32, i32, i32
  }
  func.func @transform_11(%arg0: i32) -> (i32, i32, i32) {
    %c0_i32 = arith.constant 0 : i32
    %c0_i32_0 = arith.constant 0 : i32
    %c0_i32_1 = arith.constant 0 : i32
    return %arg0, %c0_i32, %c0_i32_0 : i32, i32, i32
  }
}

module attributes {stable_mosaic.version = 11 : i64} {
  func.func @_bn_relu_kernel(%arg0: i32, %arg1: memref<32x128xf32, #tpu.memory_space<vmem>>, %arg2: memref<1x128xf32, #tpu.memory_space<vmem>>, %arg3: memref<1x128xf32, #tpu.memory_space<vmem>>, %arg4: memref<32x128xf32, #tpu.memory_space<vmem>>) attributes {dimension_semantics = [#tpu.dimension_semantics<parallel>], iteration_bounds = array<i64: 1>, scalar_prefetch = 0 : i64, scratch_operands = 0 : i64, tpu.core_type = #tpu.core_type<tc>, window_params = [{transform_indices = @transform_0, window_bounds = array<i64: 32, 128>}, {pipeline_mode = #tpu.pipeline_mode<synchronous>, transform_indices = @transform_1, window_bounds = array<i64: 1, 128>}, {pipeline_mode = #tpu.pipeline_mode<synchronous>, transform_indices = @transform_2, window_bounds = array<i64: 1, 128>}, {transform_indices = @transform_3, window_bounds = array<i64: 32, 128>}]} {
    %c0 = arith.constant 0 : index
    %c0_0 = arith.constant 0 : index
    %0 = vector.load %arg1[%c0, %c0_0] : memref<32x128xf32, #tpu.memory_space<vmem>>, vector<32x128xf32>
    %c0_1 = arith.constant 0 : index
    %c0_2 = arith.constant 0 : index
    %1 = vector.load %arg2[%c0_1, %c0_2] : memref<1x128xf32, #tpu.memory_space<vmem>>, vector<1x128xf32>
    %2 = vector.broadcast %1 : vector<1x128xf32> to vector<32x128xf32>
    %3 = arith.mulf %0, %2 : vector<32x128xf32>
    %c0_3 = arith.constant 0 : index
    %c0_4 = arith.constant 0 : index
    %4 = vector.load %arg3[%c0_3, %c0_4] : memref<1x128xf32, #tpu.memory_space<vmem>>, vector<1x128xf32>
    %5 = vector.broadcast %4 : vector<1x128xf32> to vector<32x128xf32>
    %6 = arith.addf %3, %5 : vector<32x128xf32>
    %cst = arith.constant 0.000000e+00 : f32
    %7 = vector.broadcast %cst : f32 to vector<32x128xf32>
    %8 = arith.maximumf %6, %7 : vector<32x128xf32>
    %c0_5 = arith.constant 0 : index
    %c0_6 = arith.constant 0 : index
    %9 = vector.load %arg4[%c0_5, %c0_6] : memref<32x128xf32, #tpu.memory_space<vmem>>, vector<32x128xf32>
    tpu.vector_store %arg4[%c0_5, %c0_6], %8 {strides = array<i32>} : memref<32x128xf32, #tpu.memory_space<vmem>>, vector<32x128xf32>,
    return
  }
  func.func @transform_0(%arg0: i32) -> (i32, i32) {
    %c0_i32 = arith.constant 0 : i32
    %c0_i32_0 = arith.constant 0 : i32
    return %arg0, %c0_i32 : i32, i32
  }
  func.func @transform_1(%arg0: i32) -> (i32, i32) {
    %c0_i32 = arith.constant 0 : i32
    %c0_i32_0 = arith.constant 0 : i32
    %c0_i32_1 = arith.constant 0 : i32
    return %c0_i32, %c0_i32_0 : i32, i32
  }
  func.func @transform_2(%arg0: i32) -> (i32, i32) {
    %c0_i32 = arith.constant 0 : i32
    %c0_i32_0 = arith.constant 0 : i32
    %c0_i32_1 = arith.constant 0 : i32
    return %c0_i32, %c0_i32_0 : i32, i32
  }
  func.func @transform_3(%arg0: i32) -> (i32, i32) {
    %c0_i32 = arith.constant 0 : i32
    %c0_i32_0 = arith.constant 0 : i32
    return %arg0, %c0_i32 : i32, i32
  }
}

</mosaic_0001>

<llo_original>
// kernel: tile.43
$region0: #{tile.43}
  #allocation0 [shape = 's32[1]{0}', space=sflag, size = 0x4, scoped, tag = 'scoped memory for tile.43']
  %s0 = inlined_call_operand.vmem [shape: f32[8], index: 0, kind: input, shape index: {}]
  %s1 = inlined_call_operand.vmem [shape: f32[16,8], index: 1, kind: output, shape index: {}]
  // Predicated region
  $region2: #{tile.43} parent=0 // pred_check
    _
  $region3: #{tile.43} parent=0 // pred_check_branch
    %3 = sbr.rel (0) target = $region5
  $region4: #{tile.43} parent=0 // pred_region
    _
  $region5: #{tile.43} parent=0 // pred_fallthru
    _
  %v4 = vld [vmem:[%s0] ss:$0 sm:$0xff]
  %5 = vst [vmem:[%s1] sm:$0xff] %v4
  %s6 = scalar_lea.vmem %s1, 8
  %7 = vst [vmem:[%s6] sm:$0xff] %v4

// kernel: tile.44
$region0: #{tile.44}
  %s0 = inlined_call_operand.vmem [shape: f32[16,8], index: 0, kind: input, shape index: {}]
  %s1 = inlined_call_operand.vmem [shape: f32[1,128], index: 1, kind: output, shape index: {}]
  $region1: #{tile.44} parent=0
    #allocation0 [shape = 'u8[4096]{0}', space=vmem, size = 0x1000, scoped, tag = 'scoped mem for output reshape']
    %v2 = vld [vmem:[%s0] sm:$0x1]
    %vm3 = vcmask 64512
    %4 = vst.msk [vmem:[#allocation0] sm:$0x1] %vm3, %v2
    %s5 = scalar_lea.vmem %s0, 15
    %v6 = vld [vmem:[%s5] sm:$0x1]
    %7 = vrot.lane.b32.xlu0 %v6, 120
    %v8 = vpop.permute.xlu0 %7
    %vm9 = vcmask 1048512
    %10 = vst.msk [vmem:[#allocation0] sm:$0x1] %vm9, %v8
    %s11 = scalar_lea.vmem %s0, 14
    %v12 = vld [vmem:[%s11] sm:$0x1]
    %13 = vrot.lane.b32.xlu0 %v12, 112
    %v14 = vpop.permute.xlu0 %13
    %vm15 = vcmask 982912
    %16 = vst.msk [vmem:[#allocation0] sm:$0x1] %vm15, %v14
    %s17 = scalar_lea.vmem %s0, 13
    %v18 = vld [vmem:[%s17] sm:$0x1]
    %19 = vrot.lane.b32.xlu0 %v18, 104
    %v20 = vpop.permute.xlu0 %19
    %vm21 = vcmask 917312
    %22 = vst.msk [vmem:[#allocation0] sm:$0x1] %vm21, %v20
    %s23 = scalar_lea.vmem %s0, 12
    %v24 = vld [vmem:[%s23] sm:$0x1]
    %25 = vrot.lane.b32.xlu0 %v24, 96
    %v26 = vpop.permute.xlu0 %25
    %vm27 = vcmask 851712
    %28 = vst.msk [vmem:[#allocation0] sm:$0x1] %vm27, %v26
    %s29 = scalar_lea.vmem %s0, 11
    %v30 = vld [vmem:[%s29] sm:$0x1]
    %31 = vrot.lane.b32.xlu0 %v30, 88
    %v32 = vpop.permute.xlu0 %31
    %vm33 = vcmask 786112
    %34 = vst.msk [vmem:[#allocation0] sm:$0x1] %vm33, %v32
    %s35 = scalar_lea.vmem %s0, 10
    %v36 = vld [vmem:[%s35] sm:$0x1]
    %37 = vrot.lane.b32.xlu0 %v36, 80
    %v38 = vpop.permute.xlu0 %37
    %vm39 = vcmask 720512
    %40 = vst.msk [vmem:[#allocation0] sm:$0x1] %vm39, %v38
    %s41 = scalar_lea.vmem %s0, 9
    %v42 = vld [vmem:[%s41] sm:$0x1]
    %43 = vrot.lane.b32.xlu0 %v42, 72
    %v44 = vpop.permute.xlu0 %43
    %vm45 = vcmask 654912
    %46 = vst.msk [vmem:[#allocation0] sm:$0x1] %vm45, %v44
    %s47 = scalar_lea.vmem %s0, 8
    %v48 = vld [vmem:[%s47] sm:$0x1]
    %49 = vrot.lane.b32.xlu0 %v48, 64
    %v50 = vpop.permute.xlu0 %49
    %vm51 = vcmask 589312
    %52 = vst.msk [vmem:[#allocation0] sm:$0x1] %vm51, %v50
    %s53 = scalar_lea.vmem %s0, 7
    %v54 = vld [vmem:[%s53] sm:$0x1]
    %55 = vrot.lane.b32.xlu0 %v54, 56
    %v56 = vpop.permute.xlu0 %55
    %vm57 = vcmask 523712
    %58 = vst.msk [vmem:[#allocation0] sm:$0x1] %vm57, %v56
    %s59 = scalar_lea.vmem %s0, 6
    %v60 = vld [vmem:[%s59] sm:$0x1]
    %61 = vrot.lane.b32.xlu0 %v60, 48
    %v62 = vpop.permute.xlu0 %61
    %vm63 = vcmask 458112
    %64 = vst.msk [vmem:[#allocation0] sm:$0x1] %vm63, %v62
    %s65 = scalar_lea.vmem %s0, 5
    %v66 = vld [vmem:[%s65] sm:$0x1]
    %67 = vrot.lane.b32.xlu0 %v66, 40
    %v68 = vpop.permute.xlu0 %67
    %vm69 = vcmask 392512
    %70 = vst.msk [vmem:[#allocation0] sm:$0x1] %vm69, %v68
    %s71 = scalar_lea.vmem %s0, 4
    %v72 = vld [vmem:[%s71] sm:$0x1]
    %73 = vrot.lane.b32.xlu0 %v72, 32
    %v74 = vpop.permute.xlu0 %73
    %vm75 = vcmask 326912
    %76 = vst.msk [vmem:[#allocation0] sm:$0x1] %vm75, %v74
    %s77 = scalar_lea.vmem %s0, 3
    %v78 = vld [vmem:[%s77] sm:$0x1]
    %79 = vrot.lane.b32.xlu0 %v78, 24
    %v80 = vpop.permute.xlu0 %79
    %vm81 = vcmask 261312
    %82 = vst.msk [vmem:[#allocation0] sm:$0x1] %vm81, %v80
    %s83 = scalar_lea.vmem %s0, 2
    %v84 = vld [vmem:[%s83] sm:$0x1]
    %85 = vrot.lane.b32.xlu0 %v84, 16
    %v86 = vpop.permute.xlu0 %85
    %vm87 = vcmask 195712
    %88 = vst.msk [vmem:[#allocation0] sm:$0x1] %vm87, %v86
    %s89 = scalar_lea.vmem %s0, 1
    %v90 = vld [vmem:[%s89] sm:$0x1]
    %91 = vrot.lane.b32.xlu0 %v90, 8
    %v92 = vpop.permute.xlu0 %91
    %vm93 = vcmask 130112
    %94 = vst.msk [vmem:[#allocation0] sm:$0x1] %vm93, %v92
    %s96 = sshllo.u32 0, 1
    %v98 = vld [vmem:[#allocation0] sm:%s96]
    %s99 = sshllo.u32 0, 1
    %100 = vst [vmem:[%s1] sm:%s99] %v98

// kernel: densecat_cat_diff_forward.3
$region0: #{densecat_cat_diff_forward.3}
  #allocation0 [shape = 'u32[]', space=smem, size = 0x4, offset = 0x4, fixed_abs, tag = 'smem constant byte address 0x4 - core index']
  #allocation1 [shape = 'u32[144,128]{1,0:T(1,128)}', space=vmem, size = 0x12000, scoped, tag = 'internal scratch']
  %s0 = inlined_call_operand.vmem [shape: f32[32,128], index: 0, kind: input, shape index: {}, may-alias: {0,3}]
  %s1 = inlined_call_operand.vmem [shape: f32[1,128], index: 1, kind: input, shape index: {}]
  %s2 = inlined_call_operand.vmem [shape: f32[1,128], index: 2, kind: input, shape index: {}]
  %s3 = inlined_call_operand.vmem [shape: f32[32,128], index: 3, kind: output, shape index: {}, may-alias: {0,3}]
  %s4 = sld [smem:[#allocation0]]
  $region22: #{densecat_cat_diff_forward.3} parent=0
    _
  %s6 = ssub.s32 1, %s4
  %s7 = scalar_select 0, %s6, %s4
  // Predicated region
  $region2: #{densecat_cat_diff_forward.3} parent=0 // pred_check
    _
  $region3: #{densecat_cat_diff_forward.3} parent=0 // pred_check_branch
    %9 = sbr.rel (0) target = $region5
  $region4: #{densecat_cat_diff_forward.3} parent=0 // pred_region
    _
  $region5: #{densecat_cat_diff_forward.3} parent=0 // pred_fallthru
    _
  // Predicated region
  $region6: #{densecat_cat_diff_forward.3} parent=0 // pred_check
    _
  $region7: #{densecat_cat_diff_forward.3} parent=0 // pred_check_branch
    %11 = sbr.rel (0) target = $region9
  $region8: #{densecat_cat_diff_forward.3} parent=0 // pred_region
    _
  $region9: #{densecat_cat_diff_forward.3} parent=0 // pred_fallthru
    _
  // Predicated region
  $region10: #{densecat_cat_diff_forward.3} parent=0 // pred_check
    _
  $region11: #{densecat_cat_diff_forward.3} parent=0 // pred_check_branch
    %13 = sbr.rel (0) target = $region13
  $region12: #{densecat_cat_diff_forward.3} parent=0 // pred_region
    _
  $region13: #{densecat_cat_diff_forward.3} parent=0 // pred_fallthru
    _
  %v14 = vld [vmem:[%s0] sm:$0xff]
  %v15 = vld [vmem:[%s0 + $0x8] sm:$0xff]
  %v16 = vld [vmem:[%s0 + $0x10] sm:$0xff]
  %v17 = vld [vmem:[%s0 + $0x18] sm:$0xff]
  %v18 = vld [vmem:[%s1] sm:$0x1]
  %v20 = vlaneseq
  %v21 = vshrl.u32 %v20, 7
  %v22 = vsub.s32 0, %v21
  %v23 = vrot.slane %v18, %v22
  %v25 = vmul.f32 %v14, %v23
  %v26 = vmul.f32 %v15, %v23
  %v27 = vmul.f32 %v16, %v23
  %v28 = vmul.f32 %v17, %v23
  %v29 = vld [vmem:[%s2] sm:$0x1]
  %v31 = vlaneseq
  %v32 = vshrl.u32 %v31, 7
  %v33 = vsub.s32 0, %v32
  %v34 = vrot.slane %v29, %v33
  %v36 = vadd.f32 %v25, %v34
  %v37 = vadd.f32 %v26, %v34
  %v38 = vadd.f32 %v27, %v34
  %v39 = vadd.f32 %v28, %v34
  %v40 = vmax.f32 %v36, 0.0
  %v41 = vmax.f32 %v37, 0.0
  %v42 = vmax.f32 %v38, 0.0
  %v43 = vmax.f32 %v39, 0.0
  %44 = vst [vmem:[%s3] sm:$0xff] %v40
  %45 = vst [vmem:[%s3 + $0x8] sm:$0xff] %v41
  %46 = vst [vmem:[%s3 + $0x10] sm:$0xff] %v42
  %47 = vst [vmem:[%s3 + $0x18] sm:$0xff] %v43
  // Predicated region
  $region14: #{densecat_cat_diff_forward.3} parent=0 // pred_check
    _
  $region15: #{densecat_cat_diff_forward.3} parent=0 // pred_check_branch
    %49 = sbr.rel (0) target = $region17
  $region16: #{densecat_cat_diff_forward.3} parent=0 // pred_region
    _
  $region17: #{densecat_cat_diff_forward.3} parent=0 // pred_fallthru
    _
  // Predicated region
  $region18: #{densecat_cat_diff_forward.3} parent=0 // pred_check
    _
  $region19: #{densecat_cat_diff_forward.3} parent=0 // pred_check_branch
    %51 = sbr.rel (0) target = $region21
  $region20: #{densecat_cat_diff_forward.3} parent=0 // pred_region
    _
  $region21: #{densecat_cat_diff_forward.3} parent=0 // pred_fallthru
    _

// kernel: densecat_cat_diff_forward.2
$region0: #{densecat_cat_diff_forward.2}
  #allocation0 [shape = 'u32[]', space=smem, size = 0x4, offset = 0x4, fixed_abs, tag = 'smem constant byte address 0x4 - core index']
  #allocation1 [shape = 'u32[144,128]{1,0:T(1,128)}', space=vmem, size = 0x12000, scoped, tag = 'internal scratch']
  #allocation2 [shape = 'f32[35,64]{1,0:T(8,128)}', space=vmem, size = 0x5000, scoped, tag = 'scratch operand']
  %s0 = inlined_call_operand.vmem [shape: f32[2,16,64], index: 0, kind: input, shape index: {}]
  %s1 = inlined_call_operand.vmem [shape: f32[2,16,64], index: 1, kind: input, shape index: {}]
  %s2 = inlined_call_operand.vmem [shape: bf16[3,64,64], index: 2, kind: input, shape index: {}]
  %s3 = inlined_call_operand.vmem [shape: f32[1,64], index: 3, kind: input, shape index: {}]
  %s4 = inlined_call_operand.vmem [shape: bf16[3,64,64], index: 4, kind: input, shape index: {}]
  %s5 = inlined_call_operand.vmem [shape: f32[1,64], index: 5, kind: input, shape index: {}]
  %s6 = inlined_call_operand.vmem [shape: bf16[3,64,64], index: 6, kind: input, shape index: {}]
  %s7 = inlined_call_operand.vmem [shape: f32[1,64], index: 7, kind: input, shape index: {}]
  %s8 = inlined_call_operand.vmem [shape: bf16[64,128], index: 8, kind: input, shape index: {}]
  %s9 = inlined_call_operand.vmem [shape: f32[2,16,128], index: 9, kind: output, shape index: {0}]
  %s10 = inlined_call_operand.vmem [shape: f32[2,1,128], index: 10, kind: output, shape index: {1}]
  %s11 = inlined_call_operand.vmem [shape: f32[2,1,128], index: 11, kind: output, shape index: {2}]
  %12 = xla_tuple %s9, %s10, %s11
  %s13 = sld [smem:[#allocation0]]
  $region85: #{densecat_cat_diff_forward.2} parent=0
    _
  %s15 = ssub.s32 1, %s13
  %s16 = scalar_select 0, %s15, %s13
  loop: start=0, step=1, limit=4
  $region2: #{densecat_cat_diff_forward.2} parent=0 // loop_pre_header
    _
  $region3: #{densecat_cat_diff_forward.2} parent=0 // loop_header
    %s18 = sphi 0, %s22
    %p19 = scmp.ge.s32.totalorder %s18, 4
    %s28 = sphi 0, %s30
    %s31 = sphi 0, %s28
    %s32 = sphi 0, %s31
    %s48 = sphi 0, %s32
    %s54 = sphi 0, %s56
    %s57 = sphi 0, %s54
    %s58 = sphi 0, %s57
    %s74 = sphi 0, %s58
    %s78 = sphi 0, %s78
    %s80 = sphi 0, %s78
    %s81 = sphi 0, %s80
    %s95 = sphi 0, %s81
    %s99 = sphi 0, %s99
    %s101 = sphi 0, %s99
    %s102 = sphi 0, %s101
    %s116 = sphi 0, %s102
    %s120 = sphi 0, %s120
    %s122 = sphi 0, %s120
    %s123 = sphi 0, %s122
    %s137 = sphi 0, %s123
    %s141 = sphi 0, %s141
    %s143 = sphi 0, %s141
    %s144 = sphi 0, %s143
    %s158 = sphi 0, %s144
    %s162 = sphi 0, %s162
    %s164 = sphi 0, %s162
    %s165 = sphi 0, %s164
    %s179 = sphi 0, %s165
    %s183 = sphi 0, %s183
    %s185 = sphi 0, %s183
    %s186 = sphi 0, %s185
    %s200 = sphi 0, %s186
    %s204 = sphi 0, %s204
    %s206 = sphi 0, %s204
    %s207 = sphi 0, %s206
    %s221 = sphi 0, %s207
    %s227 = sphi 0, %s229
    %s230 = sphi 0, %s227
    %s231 = sphi 0, %s230
    %s247 = sphi 0, %s231
    %s253 = sphi 0, %s255
    %s256 = sphi 0, %s253
    %s257 = sphi 0, %s256
    %s273 = sphi 0, %s257
    %s279 = sphi 0, %s281
    %s282 = sphi 0, %s279
    %s283 = sphi 0, %s282
    %s299 = sphi 0, %s283
  $region4: #{densecat_cat_diff_forward.2} parent=0 // loop_header_branch
    %21 = sbr.rel (%p19) target = $region8
  $region5: #{densecat_cat_diff_forward.2} parent=0 // loop_body
    %s23 = ssub.s32 %s18, 1
    %s24 = ssub.s32 %s18, 2
    %s25 = sadd.s32 %s18, 1
    %s26 = ssub.s32 %s18, %s25
    %p27 = scmp.eq.s32.totalorder %s26, 0
    %s29 = sadd.s32 %s28, 1
    %s30 = scalar_select %p27, %s28, %s29
    %p33 = pneg %p27
    %p34 = scmp.eq.s32.totalorder %s18, 1
    %p35 = por %p33, %p34
    %p36 = scmp.ne.s32.totalorder %s28, %s31
    %p37 = scmp.eq.s32.totalorder %s18, 0
    %p38 = por %p36, %p37
    %p39 = scmp.ne.s32.totalorder %s28, %s31
    %p40 = scmp.eq.s32.totalorder %s23, 1
    %p41 = por %p39, %p40
    %p42 = scmp.ne.s32.totalorder %s31, %s32
    %p43 = scmp.eq.s32.totalorder %s23, 0
    %p44 = por %p42, %p43
    %p45 = scmp.ne.s32.totalorder %s31, %s32
    %p46 = scmp.eq.s32.totalorder %s24, 1
    %p47 = por %p45, %p46
    %p49 = scmp.ne.s32.totalorder %s32, %s48
    %p50 = scmp.eq.s32.totalorder %s24, 0
    %p51 = por %p49, %p50
    %s52 = ssub.s32 %s18, %s25
    %p53 = scmp.eq.s32.totalorder %s52, 0
    %s55 = sadd.s32 %s54, 1
    %s56 = scalar_select %p53, %s54, %s55
    %p59 = pneg %p53
    %p60 = scmp.eq.s32.totalorder %s18, 1
    %p61 = por %p59, %p60
    %p62 = scmp.ne.s32.totalorder %s54, %s57
    %p63 = scmp.eq.s32.totalorder %s18, 0
    %p64 = por %p62, %p63
    %p65 = scmp.ne.s32.totalorder %s54, %s57
    %p66 = scmp.eq.s32.totalorder %s23, 1
    %p67 = por %p65, %p66
    %p68 = scmp.ne.s32.totalorder %s57, %s58
    %p69 = scmp.eq.s32.totalorder %s23, 0
    %p70 = por %p68, %p69
    %p71 = scmp.ne.s32.totalorder %s57, %s58
    %p72 = scmp.eq.s32.totalorder %s24, 1
    %p73 = por %p71, %p72
    %p75 = scmp.ne.s32.totalorder %s58, %s74
    %p76 = scmp.eq.s32.totalorder %s24, 0
    %p77 = por %p75, %p76
    %s79 = sadd.s32 %s78, 1
    %p82 = scmp.eq.s32.totalorder %s18, 1
    %p83 = scmp.ne.s32.totalorder %s78, %s80
    %p84 = scmp.eq.s32.totalorder %s18, 0
    %p85 = por %p83, %p84
    %p86 = scmp.ne.s32.totalorder %s78, %s80
    %p87 = scmp.eq.s32.totalorder %s23, 1
    %p88 = por %p86, %p87
    %p89 = scmp.ne.s32.totalorder %s80, %s81
    %p90 = scmp.eq.s32.totalorder %s23, 0
    %p91 = por %p89, %p90
    %p92 = scmp.ne.s32.totalorder %s80, %s81
    %p93 = scmp.eq.s32.totalorder %s24, 1
    %p94 = por %p92, %p93
    %p96 = scmp.ne.s32.totalorder %s81, %s95
    %p97 = scmp.eq.s32.totalorder %s24, 0
    %p98 = por %p96, %p97
    %s100 = sadd.s32 %s99, 1
    %p103 = scmp.eq.s32.totalorder %s18, 1
    %p104 = scmp.ne.s32.totalorder %s99, %s101
    %p105 = scmp.eq.s32.totalorder %s18, 0
    %p106 = por %p104, %p105
    %p107 = scmp.ne.s32.totalorder %s99, %s101
    %p108 = scmp.eq.s32.totalorder %s23, 1
    %p109 = por %p107, %p108
    %p110 = scmp.ne.s32.totalorder %s101, %s102
    %p111 = scmp.eq.s32.totalorder %s23, 0
    %p112 = por %p110, %p111
    %p113 = scmp.ne.s32.totalorder %s101, %s102
    %p114 = scmp.eq.s32.totalorder %s24, 1
    %p115 = por %p113, %p114
    %p117 = scmp.ne.s32.totalorder %s102, %s116
    %p118 = scmp.eq.s32.totalorder %s24, 0
    %p119 = por %p117, %p118
    %s121 = sadd.s32 %s120, 1
    %p124 = scmp.eq.s32.totalorder %s18, 1
    %p125 = scmp.ne.s32.totalorder %s120, %s122
    %p126 = scmp.eq.s32.totalorder %s18, 0
    %p127 = por %p125, %p126
    %p128 = scmp.ne.s32.totalorder %s120, %s122
    %p129 = scmp.eq.s32.totalorder %s23, 1
    %p130 = por %p128, %p129
    %p131 = scmp.ne.s32.totalorder %s122, %s123
    %p132 = scmp.eq.s32.totalorder %s23, 0
    %p133 = por %p131, %p132
    %p134 = scmp.ne.s32.totalorder %s122, %s123
    %p135 = scmp.eq.s32.totalorder %s24, 1
    %p136 = por %p134, %p135
    %p138 = scmp.ne.s32.totalorder %s123, %s137
    %p139 = scmp.eq.s32.totalorder %s24, 0
    %p140 = por %p138, %p139
    %s142 = sadd.s32 %s141, 1
    %p145 = scmp.eq.s32.totalorder %s18, 1
    %p146 = scmp.ne.s32.totalorder %s141, %s143
    %p147 = scmp.eq.s32.totalorder %s18, 0
    %p148 = por %p146, %p147
    %p149 = scmp.ne.s32.totalorder %s141, %s143
    %p150 = scmp.eq.s32.totalorder %s23, 1
    %p151 = por %p149, %p150
    %p152 = scmp.ne.s32.totalorder %s143, %s144
    %p153 = scmp.eq.s32.totalorder %s23, 0
    %p154 = por %p152, %p153
    %p155 = scmp.ne.s32.totalorder %s143, %s144
    %p156 = scmp.eq.s32.totalorder %s24, 1
    %p157 = por %p155, %p156
    %p159 = scmp.ne.s32.totalorder %s144, %s158
    %p160 = scmp.eq.s32.totalorder %s24, 0
    %p161 = por %p159, %p160
    %s163 = sadd.s32 %s162, 1
    %p166 = scmp.eq.s32.totalorder %s18, 1
    %p167 = scmp.ne.s32.totalorder %s162, %s164
    %p168 = scmp.eq.s32.totalorder %s18, 0
    %p169 = por %p167, %p168
    %p170 = scmp.ne.s32.totalorder %s162, %s164
    %p171 = scmp.eq.s32.totalorder %s23, 1
    %p172 = por %p170, %p171
    %p173 = scmp.ne.s32.totalorder %s164, %s165
    %p174 = scmp.eq.s32.totalorder %s23, 0
    %p175 = por %p173, %p174
    %p176 = scmp.ne.s32.totalorder %s164, %s165
    %p177 = scmp.eq.s32.totalorder %s24, 1
    %p178 = por %p176, %p177
    %p180 = scmp.ne.s32.totalorder %s165, %s179
    %p181 = scmp.eq.s32.totalorder %s24, 0
    %p182 = por %p180, %p181
    %s184 = sadd.s32 %s183, 1
    %p187 = scmp.eq.s32.totalorder %s18, 1
    %p188 = scmp.ne.s32.totalorder %s183, %s185
    %p189 = scmp.eq.s32.totalorder %s18, 0
    %p190 = por %p188, %p189
    %p191 = scmp.ne.s32.totalorder %s183, %s185
    %p192 = scmp.eq.s32.totalorder %s23, 1
    %p193 = por %p191, %p192
    %p194 = scmp.ne.s32.totalorder %s185, %s186
    %p195 = scmp.eq.s32.totalorder %s23, 0
    %p196 = por %p194, %p195
    %p197 = scmp.ne.s32.totalorder %s185, %s186
    %p198 = scmp.eq.s32.totalorder %s24, 1
    %p199 = por %p197, %p198
    %p201 = scmp.ne.s32.totalorder %s186, %s200
    %p202 = scmp.eq.s32.totalorder %s24, 0
    %p203 = por %p201, %p202
    %s205 = sadd.s32 %s204, 1
    %p208 = scmp.eq.s32.totalorder %s18, 1
    %p209 = scmp.ne.s32.totalorder %s204, %s206
    %p210 = scmp.eq.s32.totalorder %s18, 0
    %p211 = por %p209, %p210
    %p212 = scmp.ne.s32.totalorder %s204, %s206
    %p213 = scmp.eq.s32.totalorder %s23, 1
    %p214 = por %p212, %p213
    %p215 = scmp.ne.s32.totalorder %s206, %s207
    %p216 = scmp.eq.s32.totalorder %s23, 0
    %p217 = por %p215, %p216
    %p218 = scmp.ne.s32.totalorder %s206, %s207
    %p219 = scmp.eq.s32.totalorder %s24, 1
    %p220 = por %p218, %p219
    %p222 = scmp.ne.s32.totalorder %s207, %s221
    %p223 = scmp.eq.s32.totalorder %s24, 0
    %p224 = por %p222, %p223
    %s225 = ssub.s32 %s18, %s25
    %p226 = scmp.eq.s32.totalorder %s225, 0
    %s228 = sadd.s32 %s227, 1
    %s229 = scalar_select %p226, %s227, %s228
    %p232 = pneg %p226
    %p233 = scmp.eq.s32.totalorder %s18, 1
    %p234 = por %p232, %p233
    %p235 = scmp.ne.s32.totalorder %s227, %s230
    %p236 = scmp.eq.s32.totalorder %s18, 0
    %p237 = por %p235, %p236
    %p238 = scmp.ne.s32.totalorder %s227, %s230
    %p239 = scmp.eq.s32.totalorder %s23, 1
    %p240 = por %p238, %p239
    %p241 = scmp.ne.s32.totalorder %s230, %s231
    %p242 = scmp.eq.s32.totalorder %s23, 0
    %p243 = por %p241, %p242
    %p244 = scmp.ne.s32.totalorder %s230, %s231
    %p245 = scmp.eq.s32.totalorder %s24, 1
    %p246 = por %p244, %p245
    %p248 = scmp.ne.s32.totalorder %s231, %s247
    %p249 = scmp.eq.s32.totalorder %s24, 0
    %p250 = por %p248, %p249
    %s251 = ssub.s32 %s18, %s25
    %p252 = scmp.eq.s32.totalorder %s251, 0
    %s254 = sadd.s32 %s253, 1
    %s255 = scalar_select %p252, %s253, %s254
    %p258 = pneg %p252
    %p259 = scmp.eq.s32.totalorder %s18, 1
    %p260 = por %p258, %p259
    %p261 = scmp.ne.s32.totalorder %s253, %s256
    %p262 = scmp.eq.s32.totalorder %s18, 0
    %p263 = por %p261, %p262
    %p264 = scmp.ne.s32.totalorder %s253, %s256
    %p265 = scmp.eq.s32.totalorder %s23, 1
    %p266 = por %p264, %p265
    %p267 = scmp.ne.s32.totalorder %s256, %s257
    %p268 = scmp.eq.s32.totalorder %s23, 0
    %p269 = por %p267, %p268
    %p270 = scmp.ne.s32.totalorder %s256, %s257
    %p271 = scmp.eq.s32.totalorder %s24, 1
    %p272 = por %p270, %p271
    %p274 = scmp.ne.s32.totalorder %s257, %s273
    %p275 = scmp.eq.s32.totalorder %s24, 0
    %p276 = por %p274, %p275
    %s277 = ssub.s32 %s18, %s25
    %p278 = scmp.eq.s32.totalorder %s277, 0
    %s280 = sadd.s32 %s279, 1
    %s281 = scalar_select %p278, %s279, %s280
    %p284 = pneg %p278
    %p285 = scmp.eq.s32.totalorder %s18, 1
    %p286 = por %p284, %p285
    %p287 = scmp.ne.s32.totalorder %s279, %s282
    %p288 = scmp.eq.s32.totalorder %s18, 0
    %p289 = por %p287, %p288
    %p290 = scmp.ne.s32.totalorder %s279, %s282
    %p291 = scmp.eq.s32.totalorder %s23, 1
    %p292 = por %p290, %p291
    %p293 = scmp.ne.s32.totalorder %s282, %s283
    %p294 = scmp.eq.s32.totalorder %s23, 0
    %p295 = por %p293, %p294
    %p296 = scmp.ne.s32.totalorder %s282, %s283
    %p297 = scmp.eq.s32.totalorder %s24, 1
    %p298 = por %p296, %p297
    %p300 = scmp.ne.s32.totalorder %s283, %s299
    %p301 = scmp.eq.s32.totalorder %s24, 0
    %p302 = por %p300, %p301
    %p303 = scmp.le.s32.totalorder 1, %s18
    %p304 = scmp.lt.s32.totalorder %s18, 3
    %p305 = pnand %p303, %p304
    %p306 = pneg %p305
    // Predicated region
    $region9: #{densecat_cat_diff_forward.2} parent=5 // pred_check
      _
    $region10: #{densecat_cat_diff_forward.2} parent=5 // pred_check_branch
      %308 = sbr.rel (%p305) target = $region12
    $region11: #{densecat_cat_diff_forward.2} parent=5 // pred_region
      %s309 = ssub.s32 %s18, 1
      // Predicated region
      $region13: #{densecat_cat_diff_forward.2} parent=11 // pred_check
        %p310 = pneg %p91
      $region14: #{densecat_cat_diff_forward.2} parent=11 // pred_check_branch
        %312 = sbr.rel (%p310) target = $region16
      $region15: #{densecat_cat_diff_forward.2} parent=11 // pred_region
        _
      $region16: #{densecat_cat_diff_forward.2} parent=11 // pred_fallthru
        _
      // Predicated region
      $region17: #{densecat_cat_diff_forward.2} parent=11 // pred_check
        %p313 = pneg %p112
      $region18: #{densecat_cat_diff_forward.2} parent=11 // pred_check_branch
        %315 = sbr.rel (%p313) target = $region20
      $region19: #{densecat_cat_diff_forward.2} parent=11 // pred_region
        _
      $region20: #{densecat_cat_diff_forward.2} parent=11 // pred_fallthru
        _
      // Predicated region
      $region21: #{densecat_cat_diff_forward.2} parent=11 // pred_check
        %p316 = pneg %p133
      $region22: #{densecat_cat_diff_forward.2} parent=11 // pred_check_branch
        %318 = sbr.rel (%p316) target = $region24
      $region23: #{densecat_cat_diff_forward.2} parent=11 // pred_region
        _
      $region24: #{densecat_cat_diff_forward.2} parent=11 // pred_fallthru
        _
      // Predicated region
      $region25: #{densecat_cat_diff_forward.2} parent=11 // pred_check
        %p319 = pneg %p154
      $region26: #{densecat_cat_diff_forward.2} parent=11 // pred_check_branch
        %321 = sbr.rel (%p319) target = $region28
      $region27: #{densecat_cat_diff_forward.2} parent=11 // pred_region
        _
      $region28: #{densecat_cat_diff_forward.2} parent=11 // pred_fallthru
        _
      // Predicated region
      $region29: #{densecat_cat_diff_forward.2} parent=11 // pred_check
        %p322 = pneg %p175
      $region30: #{densecat_cat_diff_forward.2} parent=11 // pred_check_branch
        %324 = sbr.rel (%p322) target = $region32
      $region31: #{densecat_cat_diff_forward.2} parent=11 // pred_region
        _
      $region32: #{densecat_cat_diff_forward.2} parent=11 // pred_fallthru
        _
      // Predicated region
      $region33: #{densecat_cat_diff_forward.2} parent=11 // pred_check
        %p325 = pneg %p196
      $region34: #{densecat_cat_diff_forward.2} parent=11 // pred_check_branch
        %327 = sbr.rel (%p325) target = $region36
      $region35: #{densecat_cat_diff_forward.2} parent=11 // pred_region
        _
      $region36: #{densecat_cat_diff_forward.2} parent=11 // pred_fallthru
        _
      // Predicated region
      $region37: #{densecat_cat_diff_forward.2} parent=11 // pred_check
        %p328 = pneg %p217
      $region38: #{densecat_cat_diff_forward.2} parent=11 // pred_check_branch
        %330 = sbr.rel (%p328) target = $region40
      $region39: #{densecat_cat_diff_forward.2} parent=11 // pred_region
        _
      $region40: #{densecat_cat_diff_forward.2} parent=11 // pred_fallthru
        _
    $region12: #{densecat_cat_diff_forward.2} parent=5 // pred_fallthru
      _
    %p331 = scmp.lt.s32.totalorder %s18, 2
    // Predicated region
    $region41: #{densecat_cat_diff_forward.2} parent=5 // pred_check
      %p332 = pneg %p331
    $region42: #{densecat_cat_diff_forward.2} parent=5 // pred_check_branch
      %334 = sbr.rel (%p332) target = $region44
    $region43: #{densecat_cat_diff_forward.2} parent=5 // pred_region
      // Predicated region
      $region45: #{densecat_cat_diff_forward.2} parent=43 // pred_check
        %p335 = pneg %p38
      $region46: #{densecat_cat_diff_forward.2} parent=43 // pred_check_branch
        %337 = sbr.rel (%p335) target = $region48
      $region47: #{densecat_cat_diff_forward.2} parent=43 // pred_region
        %p338 = scmp.lt.s32.totalorder %s18, 1
        %s339 = scalar_select %p338, %s18, 1
        %s340 = smul.addr %s339, 2
        %s341 = smul.addr %s340, 8
        %s342 = scalar_lea.vmem %s0, %s341
      $region48: #{densecat_cat_diff_forward.2} parent=43 // pred_fallthru
        _
      // Predicated region
      $region49: #{densecat_cat_diff_forward.2} parent=43 // pred_check
        %p343 = pneg %p64
      $region50: #{densecat_cat_diff_forward.2} parent=43 // pred_check_branch
        %345 = sbr.rel (%p343) target = $region52
      $region51: #{densecat_cat_diff_forward.2} parent=43 // pred_region
        %p346 = scmp.lt.s32.totalorder %s18, 1
        %s347 = scalar_select %p346, %s18, 1
        %s348 = smul.addr %s347, 2
        %s349 = smul.addr %s348, 8
        %s350 = scalar_lea.vmem %s1, %s349
      $region52: #{densecat_cat_diff_forward.2} parent=43 // pred_fallthru
        _
    $region44: #{densecat_cat_diff_forward.2} parent=5 // pred_fallthru
      _
    %p351 = scmp.le.s32.totalorder 1, %s18
    %p352 = scmp.lt.s32.totalorder %s18, 3
    %p353 = pnand %p351, %p352
    %p354 = pneg %p353
    // Predicated region
    $region53: #{densecat_cat_diff_forward.2} parent=5 // pred_check
      _
    $region54: #{densecat_cat_diff_forward.2} parent=5 // pred_check_branch
      %356 = sbr.rel (%p353) target = $region56
    $region55: #{densecat_cat_diff_forward.2} parent=5 // pred_region
      %s357 = ssub.s32 %s18, 1
      %p358 = scmp.lt.s32.totalorder %s23, 1
      %s359 = scalar_select %p358, %s23, 1
      %s360 = smul.addr %s359, 2
      %s361 = smul.addr %s360, 8
      %s362 = scalar_lea.vmem %s0, %s361
      %p363 = pneg %p44
      %p364 = pneg %p41
      %p365 = scmp.lt.s32.totalorder %s23, 1
      %s366 = scalar_select %p365, %s23, 1
      %s367 = smul.addr %s366, 2
      %s368 = smul.addr %s367, 8
      %s369 = scalar_lea.vmem %s1, %s368
      %p370 = pneg %p70
      %p371 = pneg %p67
      %p372 = pneg %p91
      %p373 = pneg %p88
      %p374 = pneg %p112
      %p375 = pneg %p109
      %p376 = pneg %p133
      %p377 = pneg %p130
      %p378 = pneg %p154
      %p379 = pneg %p151
      %p380 = pneg %p175
      %p381 = pneg %p172
      %p382 = pneg %p196
      %p383 = pneg %p193
      %p384 = pneg %p217
      %p385 = pneg %p214
      %p386 = pneg %p243
      %p387 = pneg %p240
      %p388 = scmp.lt.s32.totalorder %s23, 1
      %s389 = scalar_select %p388, %s23, 1
      %s390 = smul.addr %s389, 2
      %s391 = smul.addr %s390, 8
      %s392 = scalar_lea.vmem %s9, %s391
      %p393 = pneg %p269
      %p394 = pneg %p266
      %p395 = scmp.lt.s32.totalorder %s23, 1
      %s396 = scalar_select %p395, %s23, 1
      %s397 = scalar_lea.vmem %s10, %s396
      %p398 = pneg %p295
      %p399 = pneg %p292
      %p400 = scmp.lt.s32.totalorder %s23, 1
      %s401 = scalar_select %p400, %s23, 1
      %s402 = scalar_lea.vmem %s11, %s401
      %p403 = scmp.lt.s32.totalorder %s23, 1
      %s404 = scalar_select %p403, %s23, 1
      %s405 = smul.addr %s404, 2
      %s406 = smul.addr %s405, 8
      %s407 = scalar_lea.vmem %s0, %s406
      %p408 = scmp.lt.s32.totalorder %s23, 1
      %s409 = scalar_select %p408, %s23, 1
      %s410 = smul.addr %s409, 2
      %s411 = smul.addr %s410, 8
      %s412 = scalar_lea.vmem %s1, %s411
      %p413 = scmp.lt.s32.totalorder %s23, 1
      %s414 = scalar_select %p413, %s23, 1
      %s415 = smul.addr %s414, 2
      %s416 = smul.addr %s415, 8
      %s417 = scalar_lea.vmem %s9, %s416
      %p418 = scmp.lt.s32.totalorder %s23, 1
      %s419 = scalar_select %p418, %s23, 1
      %s420 = scalar_lea.vmem %s10, %s419
      %p421 = scmp.lt.s32.totalorder %s23, 1
      %s422 = scalar_select %p421, %s23, 1
      %s423 = scalar_lea.vmem %s11, %s422
      %vm425 = vcmask 523264
      %426 = vst.msk [vmem:[#allocation2] sm:$0xff] %vm425, 0.0
      %427 = vst.msk [vmem:[#allocation2 + $0x8] sm:$0xff] %vm425, 0.0
      %428 = vst.msk [vmem:[#allocation2 + $0x10] sm:$0xff] %vm425, 0.0
      %429 = vst.msk [vmem:[#allocation2 + $0x18] sm:$0xff] %vm425, 0.0
      %vm430 = vcmask 518144
      %431 = vst.msk [vmem:[#allocation2 + $0x20] sm:$0x7] %vm430, 0.0
      %v432 = vld [vmem:[%s407] sm:$0xff]
      %v433 = vld [vmem:[%s407 + $0x8] sm:$0xff]
      %434 = vst.msk [vmem:[#allocation2 + $0x1] sm:$0xff] %vm425, %v432
      %435 = vst.msk [vmem:[#allocation2 + $0x9] sm:$0xff] %vm425, %v433
      %v436 = vld [vmem:[%s412] sm:$0xff]
      %v437 = vld [vmem:[%s412 + $0x8] sm:$0xff]
      %438 = vst.msk [vmem:[#allocation2 + $0x12] sm:$0xff] %vm425, %v436
      %439 = vst.msk [vmem:[#allocation2 + $0x1a] sm:$0xff] %vm425, %v437
      %v440 = vld [vmem:[#allocation2] sm:$0xff]
      %v441 = vld [vmem:[#allocation2 + $0x8] sm:$0xff]
      %v442 = vld [vmem:[#allocation2 + $0x10] sm:$0xff]
      %v443 = vld [vmem:[#allocation2 + $0x18] sm:$0xff]
      %v444 = vld [vmem:[#allocation2 + $0x20] sm:$0x1]
      %v445 = vpack.c.bf16 %v441, %v440
      %v446 = vpack.c.bf16 %v443, %v442
      %v447 = vpack.c.bf16 %v444, %v444
      %v448 = vld [vmem:[#allocation2 + $0x1] sm:$0xff]
      %v449 = vld [vmem:[#allocation2 + $0x9] sm:$0xff]
      %v450 = vld [vmem:[#allocation2 + $0x11] sm:$0xff]
      %v451 = vld [vmem:[#allocation2 + $0x19] sm:$0xff]
      %v452 = vld [vmem:[#allocation2 + $0x21] sm:$0x1]
      %v453 = vpack.c.bf16 %v449, %v448
      %v454 = vpack.c.bf16 %v451, %v450
      %v455 = vpack.c.bf16 %v452, %v452
      %v456 = vld [vmem:[#allocation2 + $0x2] sm:$0xff]
      %v457 = vld [vmem:[#allocation2 + $0xa] sm:$0xff]
      %v458 = vld [vmem:[#allocation2 + $0x12] sm:$0xff]
      %v459 = vld [vmem:[#allocation2 + $0x1a] sm:$0xff]
      %v460 = vld [vmem:[#allocation2 + $0x22] sm:$0x1]
      %v461 = vpack.c.bf16 %v457, %v456
      %v462 = vpack.c.bf16 %v459, %v458
      %v463 = vpack.c.bf16 %v460, %v460
      %v464 = vld [vmem:[%s2] sm:$0xf]
      %v465 = vld [vmem:[%s2 + $0x4] sm:$0xf]
      %v466 = vld [vmem:[%s2 + $0x8] sm:$0xf]
      %v467 = vld [vmem:[%s2 + $0xc] sm:$0xf]
      %v468 = vld [vmem:[%s2 + $0x10] sm:$0xf]
      %v469 = vld [vmem:[%s2 + $0x14] sm:$0xf]
      %v470 = vld [vmem:[%s2 + $0x18] sm:$0xf]
      %v471 = vld [vmem:[%s2 + $0x1c] sm:$0xf]
      %s472 = scalar_lea.vmem %s2, 32
      %v473 = vld [vmem:[%s472] sm:$0xf]
      %v474 = vld [vmem:[%s472 + $0x4] sm:$0xf]
      %v475 = vld [vmem:[%s472 + $0x8] sm:$0xf]
      %v476 = vld [vmem:[%s472 + $0xc] sm:$0xf]
      %v477 = vld [vmem:[%s472 + $0x10] sm:$0xf]
      %v478 = vld [vmem:[%s472 + $0x14] sm:$0xf]
      %v479 = vld [vmem:[%s472 + $0x18] sm:$0xf]
      %v480 = vld [vmem:[%s472 + $0x1c] sm:$0xf]
      %v489 = vunpack.c.l.b16 %v473
      %v490 = vunpack.c.l.b16 %v474
      %v491 = vunpack.c.l.b16 %v475
      %v492 = vunpack.c.l.b16 %v476
      %v493 = vunpack.c.l.b16 %v477
      %v494 = vunpack.c.l.b16 %v478
      %v495 = vunpack.c.l.b16 %v479
      %v496 = vunpack.c.l.b16 %v480
      %v497 = vpack.c.b16 %v490, %v489
      %v498 = vpack.c.b16 %v492, %v491
      %v499 = vpack.c.b16 %v494, %v493
      %v500 = vpack.c.b16 %v496, %v495
      %v506 = vsel %vm425, %v453, 0
      %v509 = vsel %vm425, %v454, 0
      %v512 = vsel %vm425, %v455, 0
      %514 = vmatprep.subr.bf16.mxu0 0
      %515 = vmatpush1.bf16.msra.mxu0 %v497
      %516 = vmatprep.subr.bf16.mxu0 0
      %517 = vmatpush1.bf16.msra.mxu0 %v498
      %518 = vmatprep.subr.bf16.mxu0 0
      %519 = vmatpush1.bf16.msra.mxu0 %v499
      %520 = vmatprep.subr.bf16.mxu0 0
      %521 = vmatpush1.bf16.msra.mxu0 %v500
      %522 = vmatprep.subr.bf16.mxu0 0
      %523 = vmatpush1.bf16.msra.mxu0 0
      %524 = vmatprep.subr.bf16.mxu0 0
      %525 = vmatpush1.bf16.msra.mxu0 0
      %526 = vmatprep.subr.bf16.mxu0 0
      %527 = vmatpush1.bf16.msra.mxu0 0
      %528 = vmatprep.subr.bf16.mxu0 0
      %529 = vmatpush1.bf16.msra.mxu0 0
      %530 = vmatprep.subr.bf16.mxu0 0
      %531 = vmatpush1.bf16.msra.mxu0 0
      %532 = vmatprep.subr.bf16.mxu0 0
      %533 = vmatpush1.bf16.msra.mxu0 0
      %534 = vmatprep.subr.bf16.mxu0 0
      %535 = vmatpush1.bf16.msra.mxu0 0
      %536 = vmatprep.subr.bf16.mxu0 0
      %537 = vmatpush1.bf16.msra.mxu0 0
      %538 = vmatprep.subr.bf16.mxu0 0
      %539 = vmatpush1.bf16.msra.mxu0 0
      %540 = vmatprep.subr.bf16.mxu0 0
      %541 = vmatpush1.bf16.msra.mxu0 0
      %542 = vmatprep.subr.bf16.mxu0 0
      %543 = vmatpush1.bf16.msra.mxu0 0
      %544 = vmatprep.subr.bf16.mxu0 0
      %545 = vmatpush1.bf16.msra.mxu0 0
      %546 = vmatprep.mubr.bf16.mxu0 0
      %547 = vmatmul.mubr.bf16.gmra.mrb[0].mxu0 %v506
      %v548 = vpop.f32.mrb[0].mxu0
      %v549 = vadd.f32 0.0, %v548
      %v550 = vpop.f32.mrb[0].mxu0
      %v551 = vpop.f32.mrb[0].mxu0
      %v552 = vadd.f32 0.0, %v551
      %v553 = vpop.f32.mrb[0].mxu0
      %554 = vmatprep.mubr.bf16.mxu0 0
      %555 = vmatmul.mubr.bf16.gmra.mrb[0].mxu0 %v509
      %v556 = vpop.f32.mrb[0].mxu0
      %v557 = vadd.f32 0.0, %v556
      %v558 = vpop.f32.mrb[0].mxu0
      %v559 = vpop.f32.mrb[0].mxu0
      %v560 = vadd.f32 0.0, %v559
      %v561 = vpop.f32.mrb[0].mxu0
      %562 = vmatprep.mubr.bf16.mxu0 0
      %563 = vmatmul.mubr.bf16.gmra.mrb[0].mxu0 %v512
      %v564 = vpop.f32.mrb[0].mxu0
      %v565 = vadd.f32 0.0, %v564
      %v566 = vpop.f32.mrb[0].mxu0
      %v567 = vpop.f32.mrb[0].mxu0
      %v568 = vpop.f32.mrb[0].mxu0
      %569 = vdwg.mxu0
      %v578 = vunpack.c.l.b16 %v464
      %v579 = vunpack.c.l.b16 %v465
      %v580 = vunpack.c.l.b16 %v466
      %v581 = vunpack.c.l.b16 %v467
      %v582 = vunpack.c.l.b16 %v468
      %v583 = vunpack.c.l.b16 %v469
      %v584 = vunpack.c.l.b16 %v470
      %v585 = vunpack.c.l.b16 %v471
      %v586 = vpack.c.b16 %v579, %v578
      %v587 = vpack.c.b16 %v581, %v580
      %v588 = vpack.c.b16 %v583, %v582
      %v589 = vpack.c.b16 %v585, %v584
      %v595 = vsel %vm425, %v445, 0
      %v598 = vsel %vm425, %v446, 0
      %v601 = vsel %vm425, %v447, 0
      %603 = vmatprep.subr.bf16.mxu0 0
      %604 = vmatpush1.bf16.msra.mxu0 %v586
      %605 = vmatprep.subr.bf16.mxu0 0
      %606 = vmatpush1.bf16.msra.mxu0 %v587
      %607 = vmatprep.subr.bf16.mxu0 0
      %608 = vmatpush1.bf16.msra.mxu0 %v588
      %609 = vmatprep.subr.bf16.mxu0 0
      %610 = vmatpush1.bf16.msra.mxu0 %v589
      %611 = vmatprep.subr.bf16.mxu0 0
      %612 = vmatpush1.bf16.msra.mxu0 0
      %613 = vmatprep.subr.bf16.mxu0 0
      %614 = vmatpush1.bf16.msra.mxu0 0
      %615 = vmatprep.subr.bf16.mxu0 0
      %616 = vmatpush1.bf16.msra.mxu0 0
      %617 = vmatprep.subr.bf16.mxu0 0
      %618 = vmatpush1.bf16.msra.mxu0 0
      %619 = vmatprep.subr.bf16.mxu0 0
      %620 = vmatpush1.bf16.msra.mxu0 0
      %621 = vmatprep.subr.bf16.mxu0 0
      %622 = vmatpush1.bf16.msra.mxu0 0
      %623 = vmatprep.subr.bf16.mxu0 0
      %624 = vmatpush1.bf16.msra.mxu0 0
      %625 = vmatprep.subr.bf16.mxu0 0
      %626 = vmatpush1.bf16.msra.mxu0 0
      %627 = vmatprep.subr.bf16.mxu0 0
      %628 = vmatpush1.bf16.msra.mxu0 0
      %629 = vmatprep.subr.bf16.mxu0 0
      %630 = vmatpush1.bf16.msra.mxu0 0
      %631 = vmatprep.subr.bf16.mxu0 0
      %632 = vmatpush1.bf16.msra.mxu0 0
      %633 = vmatprep.subr.bf16.mxu0 0
      %634 = vmatpush1.bf16.msra.mxu0 0
      %635 = vmatprep.mubr.bf16.mxu0 0
      %636 = vmatmul.mubr.bf16.gmra.mrb[0].mxu0 %v595
      %v637 = vpop.f32.mrb[0].mxu0
      %v638 = vadd.f32 %v549, %v637
      %v639 = vpop.f32.mrb[0].mxu0
      %v640 = vpop.f32.mrb[0].mxu0
      %v641 = vadd.f32 %v552, %v640
      %v642 = vpop.f32.mrb[0].mxu0
      %643 = vmatprep.mubr.bf16.mxu0 0
      %644 = vmatmul.mubr.bf16.gmra.mrb[0].mxu0 %v598
      %v645 = vpop.f32.mrb[0].mxu0
      %v646 = vadd.f32 %v557, %v645
      %v647 = vpop.f32.mrb[0].mxu0
      %v648 = vpop.f32.mrb[0].mxu0
      %v649 = vadd.f32 %v560, %v648
      %v650 = vpop.f32.mrb[0].mxu0
      %651 = vmatprep.mubr.bf16.mxu0 0
      %652 = vmatmul.mubr.bf16.gmra.mrb[0].mxu0 %v601
      %v653 = vpop.f32.mrb[0].mxu0
      %v654 = vadd.f32 %v565, %v653
      %v655 = vpop.f32.mrb[0].mxu0
      %v656 = vpop.f32.mrb[0].mxu0
      %v657 = vpop.f32.mrb[0].mxu0
      %658 = vdwg.mxu0
      %s659 = scalar_lea.vmem %s2, 64
      %v660 = vld [vmem:[%s659] sm:$0xf]
      %v661 = vld [vmem:[%s659 + $0x4] sm:$0xf]
      %v662 = vld [vmem:[%s659 + $0x8] sm:$0xf]
      %v663 = vld [vmem:[%s659 + $0xc] sm:$0xf]
      %v664 = vld [vmem:[%s659 + $0x10] sm:$0xf]
      %v665 = vld [vmem:[%s659 + $0x14] sm:$0xf]
      %v666 = vld [vmem:[%s659 + $0x18] sm:$0xf]
      %v667 = vld [vmem:[%s659 + $0x1c] sm:$0xf]
      %v676 = vunpack.c.l.b16 %v660
      %v677 = vunpack.c.l.b16 %v661
      %v678 = vunpack.c.l.b16 %v662
      %v679 = vunpack.c.l.b16 %v663
      %v680 = vunpack.c.l.b16 %v664
      %v681 = vunpack.c.l.b16 %v665
      %v682 = vunpack.c.l.b16 %v666
      %v683 = vunpack.c.l.b16 %v667
      %v684 = vpack.c.b16 %v677, %v676
      %v685 = vpack.c.b16 %v679, %v678
      %v686 = vpack.c.b16 %v681, %v680
      %v687 = vpack.c.b16 %v683, %v682
      %v693 = vsel %vm425, %v461, 0
      %v696 = vsel %vm425, %v462, 0
      %v699 = vsel %vm425, %v463, 0
      %701 = vmatprep.subr.bf16.mxu0 0
      %702 = vmatpush1.bf16.msra.mxu0 %v684
      %703 = vmatprep.subr.bf16.mxu0 0
      %704 = vmatpush1.bf16.msra.mxu0 %v685
      %705 = vmatprep.subr.bf16.mxu0 0
      %706 = vmatpush1.bf16.msra.mxu0 %v686
      %707 = vmatprep.subr.bf16.mxu0 0
      %708 = vmatpush1.bf16.msra.mxu0 %v687
      %709 = vmatprep.subr.bf16.mxu0 0
      %710 = vmatpush1.bf16.msra.mxu0 0
      %711 = vmatprep.subr.bf16.mxu0 0
      %712 = vmatpush1.bf16.msra.mxu0 0
      %713 = vmatprep.subr.bf16.mxu0 0
      %714 = vmatpush1.bf16.msra.mxu0 0
      %715 = vmatprep.subr.bf16.mxu0 0
      %716 = vmatpush1.bf16.msra.mxu0 0
      %717 = vmatprep.subr.bf16.mxu0 0
      %718 = vmatpush1.bf16.msra.mxu0 0
      %719 = vmatprep.subr.bf16.mxu0 0
      %720 = vmatpush1.bf16.msra.mxu0 0
      %721 = vmatprep.subr.bf16.mxu0 0
      %722 = vmatpush1.bf16.msra.mxu0 0
      %723 = vmatprep.subr.bf16.mxu0 0
      %724 = vmatpush1.bf16.msra.mxu0 0
      %725 = vmatprep.subr.bf16.mxu0 0
      %726 = vmatpush1.bf16.msra.mxu0 0
      %727 = vmatprep.subr.bf16.mxu0 0
      %728 = vmatpush1.bf16.msra.mxu0 0
      %729 = vmatprep.subr.bf16.mxu0 0
      %730 = vmatpush1.bf16.msra.mxu0 0
      %731 = vmatprep.subr.bf16.mxu0 0
      %732 = vmatpush1.bf16.msra.mxu0 0
      %733 = vmatprep.mubr.bf16.mxu0 0
      %734 = vmatmul.mubr.bf16.gmra.mrb[0].mxu0 %v693
      %v735 = vpop.f32.mrb[0].mxu0
      %v736 = vadd.f32 0.0, %v735
      %v737 = vpop.f32.mrb[0].mxu0
      %v738 = vpop.f32.mrb[0].mxu0
      %v739 = vadd.f32 0.0, %v738
      %v740 = vpop.f32.mrb[0].mxu0
      %741 = vmatprep.mubr.bf16.mxu0 0
      %742 = vmatmul.mubr.bf16.gmra.mrb[0].mxu0 %v696
      %v743 = vpop.f32.mrb[0].mxu0
      %v744 = vadd.f32 0.0, %v743
      %v745 = vpop.f32.mrb[0].mxu0
      %v746 = vpop.f32.mrb[0].mxu0
      %v747 = vadd.f32 0.0, %v746
      %v748 = vpop.f32.mrb[0].mxu0
      %749 = vmatprep.mubr.bf16.mxu0 0
      %750 = vmatmul.mubr.bf16.gmra.mrb[0].mxu0 %v699
      %v751 = vpop.f32.mrb[0].mxu0
      %v752 = vadd.f32 0.0, %v751
      %v753 = vpop.f32.mrb[0].mxu0
      %v754 = vpop.f32.mrb[0].mxu0
      %v755 = vpop.f32.mrb[0].mxu0
      %756 = vdwg.mxu0
      %v757 = vadd.f32 %v638, %v736
      %v758 = vadd.f32 %v641, %v739
      %v759 = vadd.f32 %v646, %v744
      %v760 = vadd.f32 %v649, %v747
      %v761 = vadd.f32 %v654, %v752
      %v762 = vld [vmem:[%s3] sm:$0x1]
      %v764 = vlaneseq
      %v765 = vshrl.u32 %v764, 7
      %v766 = vsub.s32 0, %v765
      %v767 = vrot.slane %v762, %v766
      %v769 = vadd.f32 %v757, %v767
      %v770 = vadd.f32 %v758, %v767
      %v771 = vadd.f32 %v759, %v767
      %v772 = vadd.f32 %v760, %v767
      %v773 = vadd.f32 %v761, %v767
      %v774 = vmax.f32 %v769, 0.0
      %v775 = vmax.f32 %v770, 0.0
      %v776 = vmax.f32 %v771, 0.0
      %v777 = vmax.f32 %v772, 0.0
      %v778 = vmax.f32 %v773, 0.0
      %779 = vst.msk [vmem:[#allocation2 + $0x1] sm:$0xff] %vm425, %v774
      %780 = vst.msk [vmem:[#allocation2 + $0x9] sm:$0xff] %vm425, %v775
      %vm781 = vcmask 523265
      %782 = vst.msk [vmem:[#allocation2 + $0x11] sm:$0xfe] %vm781, %v776
      %783 = vst.msk [vmem:[#allocation2 + $0x19] sm:$0xff] %vm425, %v777
      %vm784 = vcmask 516096
      %785 = vst.msk [vmem:[#allocation2 + $0x21] sm:$0x1] %vm784, %v778
      %v786 = vld [vmem:[#allocation2] sm:$0xff]
      %v787 = vld [vmem:[#allocation2 + $0x8] sm:$0xff]
      %v788 = vld [vmem:[#allocation2 + $0x10] sm:$0xff]
      %v789 = vld [vmem:[#allocation2 + $0x18] sm:$0xff]
      %v790 = vld [vmem:[#allocation2 + $0x20] sm:$0x1]
      %v791 = vpack.c.bf16 %v787, %v786
      %v792 = vpack.c.bf16 %v789, %v788
      %v793 = vpack.c.bf16 %v790, %v790
      %v794 = vld [vmem:[#allocation2 + $0x1] sm:$0xff]
      %v795 = vld [vmem:[#allocation2 + $0x9] sm:$0xff]
      %v796 = vld [vmem:[#allocation2 + $0x11] sm:$0xff]
      %v797 = vld [vmem:[#allocation2 + $0x19] sm:$0xff]
      %v798 = vld [vmem:[#allocation2 + $0x21] sm:$0x1]
      %v799 = vpack.c.bf16 %v795, %v794
      %v800 = vpack.c.bf16 %v797, %v796
      %v801 = vpack.c.bf16 %v798, %v798
      %v802 = vld [vmem:[#allocation2 + $0x2] sm:$0xff]
      %v803 = vld [vmem:[#allocation2 + $0xa] sm:$0xff]
      %v804 = vld [vmem:[#allocation2 + $0x12] sm:$0xff]
      %v805 = vld [vmem:[#allocation2 + $0x1a] sm:$0xff]
      %v806 = vld [vmem:[#allocation2 + $0x22] sm:$0x1]
      %v807 = vpack.c.bf16 %v803, %v802
      %v808 = vpack.c.bf16 %v805, %v804
      %v809 = vpack.c.bf16 %v806, %v806
      %v810 = vld [vmem:[%s4] sm:$0xf]
      %v811 = vld [vmem:[%s4 + $0x4] sm:$0xf]
      %v812 = vld [vmem:[%s4 + $0x8] sm:$0xf]
      %v813 = vld [vmem:[%s4 + $0xc] sm:$0xf]
      %v814 = vld [vmem:[%s4 + $0x10] sm:$0xf]
      %v815 = vld [vmem:[%s4 + $0x14] sm:$0xf]
      %v816 = vld [vmem:[%s4 + $0x18] sm:$0xf]
      %v817 = vld [vmem:[%s4 + $0x1c] sm:$0xf]
      %s818 = scalar_lea.vmem %s4, 32
      %v819 = vld [vmem:[%s818] sm:$0xf]
      %v820 = vld [vmem:[%s818 + $0x4] sm:$0xf]
      %v821 = vld [vmem:[%s818 + $0x8] sm:$0xf]
      %v822 = vld [vmem:[%s818 + $0xc] sm:$0xf]
      %v823 = vld [vmem:[%s818 + $0x10] sm:$0xf]
      %v824 = vld [vmem:[%s818 + $0x14] sm:$0xf]
      %v825 = vld [vmem:[%s818 + $0x18] sm:$0xf]
      %v826 = vld [vmem:[%s818 + $0x1c] sm:$0xf]
      %v835 = vunpack.c.l.b16 %v819
      %v836 = vunpack.c.l.b16 %v820
      %v837 = vunpack.c.l.b16 %v821
      %v838 = vunpack.c.l.b16 %v822
      %v839 = vunpack.c.l.b16 %v823
      %v840 = vunpack.c.l.b16 %v824
      %v841 = vunpack.c.l.b16 %v825
      %v842 = vunpack.c.l.b16 %v826
      %v843 = vpack.c.b16 %v836, %v835
      %v844 = vpack.c.b16 %v838, %v837
      %v845 = vpack.c.b16 %v840, %v839
      %v846 = vpack.c.b16 %v842, %v841
      %v852 = vsel %vm425, %v799, 0
      %v855 = vsel %vm425, %v800, 0
      %v858 = vsel %vm425, %v801, 0
      %860 = vmatprep.subr.bf16.mxu0 0
      %861 = vmatpush1.bf16.msra.mxu0 %v843
      %862 = vmatprep.subr.bf16.mxu0 0
      %863 = vmatpush1.bf16.msra.mxu0 %v844
      %864 = vmatprep.subr.bf16.mxu0 0
      %865 = vmatpush1.bf16.msra.mxu0 %v845
      %866 = vmatprep.subr.bf16.mxu0 0
      %867 = vmatpush1.bf16.msra.mxu0 %v846
      %868 = vmatprep.subr.bf16.mxu0 0
      %869 = vmatpush1.bf16.msra.mxu0 0
      %870 = vmatprep.subr.bf16.mxu0 0
      %871 = vmatpush1.bf16.msra.mxu0 0
      %872 = vmatprep.subr.bf16.mxu0 0
      %873 = vmatpush1.bf16.msra.mxu0 0
      %874 = vmatprep.subr.bf16.mxu0 0
      %875 = vmatpush1.bf16.msra.mxu0 0
      %876 = vmatprep.subr.bf16.mxu0 0
      %877 = vmatpush1.bf16.msra.mxu0 0
      %878 = vmatprep.subr.bf16.mxu0 0
      %879 = vmatpush1.bf16.msra.mxu0 0
      %880 = vmatprep.subr.bf16.mxu0 0
      %881 = vmatpush1.bf16.msra.mxu0 0
      %882 = vmatprep.subr.bf16.mxu0 0
      %883 = vmatpush1.bf16.msra.mxu0 0
      %884 = vmatprep.subr.bf16.mxu0 0
      %885 = vmatpush1.bf16.msra.mxu0 0
      %886 = vmatprep.subr.bf16.mxu0 0
      %887 = vmatpush1.bf16.msra.mxu0 0
      %888 = vmatprep.subr.bf16.mxu0 0
      %889 = vmatpush1.bf16.msra.mxu0 0
      %890 = vmatprep.subr.bf16.mxu0 0
      %891 = vmatpush1.bf16.msra.mxu0 0
      %892 = vmatprep.mubr.bf16.mxu0 0
      %893 = vmatmul.mubr.bf16.gmra.mrb[0].mxu0 %v852
      %v894 = vpop.f32.mrb[0].mxu0
      %v895 = vadd.f32 0.0, %v894
      %v896 = vpop.f32.mrb[0].mxu0
      %v897 = vpop.f32.mrb[0].mxu0
      %v898 = vadd.f32 0.0, %v897
      %v899 = vpop.f32.mrb[0].mxu0
      %900 = vmatprep.mubr.bf16.mxu0 0
      %901 = vmatmul.mubr.bf16.gmra.mrb[0].mxu0 %v855
      %v902 = vpop.f32.mrb[0].mxu0
      %v903 = vadd.f32 0.0, %v902
      %v904 = vpop.f32.mrb[0].mxu0
      %v905 = vpop.f32.mrb[0].mxu0
      %v906 = vadd.f32 0.0, %v905
      %v907 = vpop.f32.mrb[0].mxu0
      %908 = vmatprep.mubr.bf16.mxu0 0
      %909 = vmatmul.mubr.bf16.gmra.mrb[0].mxu0 %v858
      %v910 = vpop.f32.mrb[0].mxu0
      %v911 = vadd.f32 0.0, %v910
      %v912 = vpop.f32.mrb[0].mxu0
      %v913 = vpop.f32.mrb[0].mxu0
      %v914 = vpop.f32.mrb[0].mxu0
      %915 = vdwg.mxu0
      %v924 = vunpack.c.l.b16 %v810
      %v925 = vunpack.c.l.b16 %v811
      %v926 = vunpack.c.l.b16 %v812
      %v927 = vunpack.c.l.b16 %v813
      %v928 = vunpack.c.l.b16 %v814
      %v929 = vunpack.c.l.b16 %v815
      %v930 = vunpack.c.l.b16 %v816
      %v931 = vunpack.c.l.b16 %v817
      %v932 = vpack.c.b16 %v925, %v924
      %v933 = vpack.c.b16 %v927, %v926
      %v934 = vpack.c.b16 %v929, %v928
      %v935 = vpack.c.b16 %v931, %v930
      %v941 = vsel %vm425, %v791, 0
      %v944 = vsel %vm425, %v792, 0
      %v947 = vsel %vm425, %v793, 0
      %949 = vmatprep.subr.bf16.mxu0 0
      %950 = vmatpush1.bf16.msra.mxu0 %v932
      %951 = vmatprep.subr.bf16.mxu0 0
      %952 = vmatpush1.bf16.msra.mxu0 %v933
      %953 = vmatprep.subr.bf16.mxu0 0
      %954 = vmatpush1.bf16.msra.mxu0 %v934
      %955 = vmatprep.subr.bf16.mxu0 0
      %956 = vmatpush1.bf16.msra.mxu0 %v935
      %957 = vmatprep.subr.bf16.mxu0 0
      %958 = vmatpush1.bf16.msra.mxu0 0
      %959 = vmatprep.subr.bf16.mxu0 0
      %960 = vmatpush1.bf16.msra.mxu0 0
      %961 = vmatprep.subr.bf16.mxu0 0
      %962 = vmatpush1.bf16.msra.mxu0 0
      %963 = vmatprep.subr.bf16.mxu0 0
      %964 = vmatpush1.bf16.msra.mxu0 0
      %965 = vmatprep.subr.bf16.mxu0 0
      %966 = vmatpush1.bf16.msra.mxu0 0
      %967 = vmatprep.subr.bf16.mxu0 0
      %968 = vmatpush1.bf16.msra.mxu0 0
      %969 = vmatprep.subr.bf16.mxu0 0
      %970 = vmatpush1.bf16.msra.mxu0 0
      %971 = vmatprep.subr.bf16.mxu0 0
      %972 = vmatpush1.bf16.msra.mxu0 0
      %973 = vmatprep.subr.bf16.mxu0 0
      %974 = vmatpush1.bf16.msra.mxu0 0
      %975 = vmatprep.subr.bf16.mxu0 0
      %976 = vmatpush1.bf16.msra.mxu0 0
      %977 = vmatprep.subr.bf16.mxu0 0
      %978 = vmatpush1.bf16.msra.mxu0 0
      %979 = vmatprep.subr.bf16.mxu0 0
      %980 = vmatpush1.bf16.msra.mxu0 0
      %981 = vmatprep.mubr.bf16.mxu0 0
      %982 = vmatmul.mubr.bf16.gmra.mrb[0].mxu0 %v941
      %v983 = vpop.f32.mrb[0].mxu0
      %v984 = vadd.f32 %v895, %v983
      %v985 = vpop.f32.mrb[0].mxu0
      %v986 = vpop.f32.mrb[0].mxu0
      %v987 = vadd.f32 %v898, %v986
      %v988 = vpop.f32.mrb[0].mxu0
      %989 = vmatprep.mubr.bf16.mxu0 0
      %990 = vmatmul.mubr.bf16.gmra.mrb[0].mxu0 %v944
      %v991 = vpop.f32.mrb[0].mxu0
      %v992 = vadd.f32 %v903, %v991
      %v993 = vpop.f32.mrb[0].mxu0
      %v994 = vpop.f32.mrb[0].mxu0
      %v995 = vadd.f32 %v906, %v994
      %v996 = vpop.f32.mrb[0].mxu0
      %997 = vmatprep.mubr.bf16.mxu0 0
      %998 = vmatmul.mubr.bf16.gmra.mrb[0].mxu0 %v947
      %v999 = vpop.f32.mrb[0].mxu0
      %v1000 = vadd.f32 %v911, %v999
      %v1001 = vpop.f32.mrb[0].mxu0
      %v1002 = vpop.f32.mrb[0].mxu0
      %v1003 = vpop.f32.mrb[0].mxu0
      %1004 = vdwg.mxu0
      %s1005 = scalar_lea.vmem %s4, 64
      %v1006 = vld [vmem:[%s1005] sm:$0xf]
      %v1007 = vld [vmem:[%s1005 + $0x4] sm:$0xf]
      %v1008 = vld [vmem:[%s1005 + $0x8] sm:$0xf]
      %v1009 = vld [vmem:[%s1005 + $0xc] sm:$0xf]
      %v1010 = vld [vmem:[%s1005 + $0x10] sm:$0xf]
      %v1011 = vld [vmem:[%s1005 + $0x14] sm:$0xf]
      %v1012 = vld [vmem:[%s1005 + $0x18] sm:$0xf]
      %v1013 = vld [vmem:[%s1005 + $0x1c] sm:$0xf]
      %v1022 = vunpack.c.l.b16 %v1006
      %v1023 = vunpack.c.l.b16 %v1007
      %v1024 = vunpack.c.l.b16 %v1008
      %v1025 = vunpack.c.l.b16 %v1009
      %v1026 = vunpack.c.l.b16 %v1010
      %v1027 = vunpack.c.l.b16 %v1011
      %v1028 = vunpack.c.l.b16 %v1012
      %v1029 = vunpack.c.l.b16 %v1013
      %v1030 = vpack.c.b16 %v1023, %v1022
      %v1031 = vpack.c.b16 %v1025, %v1024
      %v1032 = vpack.c.b16 %v1027, %v1026
      %v1033 = vpack.c.b16 %v1029, %v1028
      %v1039 = vsel %vm425, %v807, 0
      %v1042 = vsel %vm425, %v808, 0
      %v1045 = vsel %vm425, %v809, 0
      %1047 = vmatprep.subr.bf16.mxu0 0
      %1048 = vmatpush1.bf16.msra.mxu0 %v1030
      %1049 = vmatprep.subr.bf16.mxu0 0
      %1050 = vmatpush1.bf16.msra.mxu0 %v1031
      %1051 = vmatprep.subr.bf16.mxu0 0
      %1052 = vmatpush1.bf16.msra.mxu0 %v1032
      %1053 = vmatprep.subr.bf16.mxu0 0
      %1054 = vmatpush1.bf16.msra.mxu0 %v1033
      %1055 = vmatprep.subr.bf16.mxu0 0
      %1056 = vmatpush1.bf16.msra.mxu0 0
      %1057 = vmatprep.subr.bf16.mxu0 0
      %1058 = vmatpush1.bf16.msra.mxu0 0
      %1059 = vmatprep.subr.bf16.mxu0 0
      %1060 = vmatpush1.bf16.msra.mxu0 0
      %1061 = vmatprep.subr.bf16.mxu0 0
      %1062 = vmatpush1.bf16.msra.mxu0 0
      %1063 = vmatprep.subr.bf16.mxu0 0
      %1064 = vmatpush1.bf16.msra.mxu0 0
      %1065 = vmatprep.subr.bf16.mxu0 0
      %1066 = vmatpush1.bf16.msra.mxu0 0
      %1067 = vmatprep.subr.bf16.mxu0 0
      %1068 = vmatpush1.bf16.msra.mxu0 0
      %1069 = vmatprep.subr.bf16.mxu0 0
      %1070 = vmatpush1.bf16.msra.mxu0 0
      %1071 = vmatprep.subr.bf16.mxu0 0
      %1072 = vmatpush1.bf16.msra.mxu0 0
      %1073 = vmatprep.subr.bf16.mxu0 0
      %1074 = vmatpush1.bf16.msra.mxu0 0
      %1075 = vmatprep.subr.bf16.mxu0 0
      %1076 = vmatpush1.bf16.msra.mxu0 0
      %1077 = vmatprep.subr.bf16.mxu0 0
      %1078 = vmatpush1.bf16.msra.mxu0 0
      %1079 = vmatprep.mubr.bf16.mxu0 0
      %1080 = vmatmul.mubr.bf16.gmra.mrb[0].mxu0 %v1039
      %v1081 = vpop.f32.mrb[0].mxu0
      %v1082 = vadd.f32 0.0, %v1081
      %v1083 = vpop.f32.mrb[0].mxu0
      %v1084 = vpop.f32.mrb[0].mxu0
      %v1085 = vadd.f32 0.0, %v1084
      %v1086 = vpop.f32.mrb[0].mxu0
      %1087 = vmatprep.mubr.bf16.mxu0 0
      %1088 = vmatmul.mubr.bf16.gmra.mrb[0].mxu0 %v1042
      %v1089 = vpop.f32.mrb[0].mxu0
      %v1090 = vadd.f32 0.0, %v1089
      %v1091 = vpop.f32.mrb[0].mxu0
      %v1092 = vpop.f32.mrb[0].mxu0
      %v1093 = vadd.f32 0.0, %v1092
      %v1094 = vpop.f32.mrb[0].mxu0
      %1095 = vmatprep.mubr.bf16.mxu0 0
      %1096 = vmatmul.mubr.bf16.gmra.mrb[0].mxu0 %v1045
      %v1097 = vpop.f32.mrb[0].mxu0
      %v1098 = vadd.f32 0.0, %v1097
      %v1099 = vpop.f32.mrb[0].mxu0
      %v1100 = vpop.f32.mrb[0].mxu0
      %v1101 = vpop.f32.mrb[0].mxu0
      %1102 = vdwg.mxu0
      %v1103 = vadd.f32 %v984, %v1082
      %v1104 = vadd.f32 %v987, %v1085
      %v1105 = vadd.f32 %v992, %v1090
      %v1106 = vadd.f32 %v995, %v1093
      %v1107 = vadd.f32 %v1000, %v1098
      %v1108 = vld [vmem:[%s5] sm:$0x1]
      %v1110 = vlaneseq
      %v1111 = vshrl.u32 %v1110, 7
      %v1112 = vsub.s32 0, %v1111
      %v1113 = vrot.slane %v1108, %v1112
      %v1115 = vadd.f32 %v1103, %v1113
      %v1116 = vadd.f32 %v1104, %v1113
      %v1117 = vadd.f32 %v1105, %v1113
      %v1118 = vadd.f32 %v1106, %v1113
      %v1119 = vadd.f32 %v1107, %v1113
      %v1120 = vmax.f32 %v1115, 0.0
      %v1121 = vmax.f32 %v1116, 0.0
      %v1122 = vmax.f32 %v1117, 0.0
      %v1123 = vmax.f32 %v1118, 0.0
      %v1124 = vmax.f32 %v1119, 0.0
      %v1125 = vadd.f32 %v1120, %v774
      %v1126 = vadd.f32 %v1121, %v775
      %v1127 = vadd.f32 %v1122, %v776
      %v1128 = vadd.f32 %v1123, %v777
      %v1129 = vadd.f32 %v1124, %v778
      %1130 = vst.msk [vmem:[#allocation2 + $0x1] sm:$0xff] %vm425, %v1125
      %1131 = vst.msk [vmem:[#allocation2 + $0x9] sm:$0xff] %vm425, %v1126
      %1132 = vst.msk [vmem:[#allocation2 + $0x11] sm:$0xfe] %vm781, %v1127
      %1133 = vst.msk [vmem:[#allocation2 + $0x19] sm:$0xff] %vm425, %v1128
      %1134 = vst.msk [vmem:[#allocation2 + $0x21] sm:$0x1] %vm784, %v1129
      %v1135 = vld [vmem:[#allocation2] sm:$0xff]
      %v1136 = vld [vmem:[#allocation2 + $0x8] sm:$0xff]
      %v1137 = vld [vmem:[#allocation2 + $0x10] sm:$0xff]
      %v1138 = vld [vmem:[#allocation2 + $0x18] sm:$0xff]
      %v1139 = vld [vmem:[#allocation2 + $0x20] sm:$0x1]
      %v1140 = vpack.c.bf16 %v1136, %v1135
      %v1141 = vpack.c.bf16 %v1138, %v1137
      %v1142 = vpack.c.bf16 %v1139, %v1139
      %v1143 = vld [vmem:[#allocation2 + $0x1] sm:$0xff]
      %v1144 = vld [vmem:[#allocation2 + $0x9] sm:$0xff]
      %v1145 = vld [vmem:[#allocation2 + $0x11] sm:$0xff]
      %v1146 = vld [vmem:[#allocation2 + $0x19] sm:$0xff]
      %v1147 = vld [vmem:[#allocation2 + $0x21] sm:$0x1]
      %v1148 = vpack.c.bf16 %v1144, %v1143
      %v1149 = vpack.c.bf16 %v1146, %v1145
      %v1150 = vpack.c.bf16 %v1147, %v1147
      %v1151 = vld [vmem:[#allocation2 + $0x2] sm:$0xff]
      %v1152 = vld [vmem:[#allocation2 + $0xa] sm:$0xff]
      %v1153 = vld [vmem:[#allocation2 + $0x12] sm:$0xff]
      %v1154 = vld [vmem:[#allocation2 + $0x1a] sm:$0xff]
      %v1155 = vld [vmem:[#allocation2 + $0x22] sm:$0x1]
      %v1156 = vpack.c.bf16 %v1152, %v1151
      %v1157 = vpack.c.bf16 %v1154, %v1153
      %v1158 = vpack.c.bf16 %v1155, %v1155
      %v1159 = vld [vmem:[%s6] sm:$0xf]
      %v1160 = vld [vmem:[%s6 + $0x4] sm:$0xf]
      %v1161 = vld [vmem:[%s6 + $0x8] sm:$0xf]
      %v1162 = vld [vmem:[%s6 + $0xc] sm:$0xf]
      %v1163 = vld [vmem:[%s6 + $0x10] sm:$0xf]
      %v1164 = vld [vmem:[%s6 + $0x14] sm:$0xf]
      %v1165 = vld [vmem:[%s6 + $0x18] sm:$0xf]
      %v1166 = vld [vmem:[%s6 + $0x1c] sm:$0xf]
      %s1167 = scalar_lea.vmem %s6, 32
      %v1168 = vld [vmem:[%s1167] sm:$0xf]
      %v1169 = vld [vmem:[%s1167 + $0x4] sm:$0xf]
      %v1170 = vld [vmem:[%s1167 + $0x8] sm:$0xf]
      %v1171 = vld [vmem:[%s1167 + $0xc] sm:$0xf]
      %v1172 = vld [vmem:[%s1167 + $0x10] sm:$0xf]
      %v1173 = vld [vmem:[%s1167 + $0x14] sm:$0xf]
      %v1174 = vld [vmem:[%s1167 + $0x18] sm:$0xf]
      %v1175 = vld [vmem:[%s1167 + $0x1c] sm:$0xf]
      %v1184 = vunpack.c.l.b16 %v1168
      %v1185 = vunpack.c.l.b16 %v1169
      %v1186 = vunpack.c.l.b16 %v1170
      %v1187 = vunpack.c.l.b16 %v1171
      %v1188 = vunpack.c.l.b16 %v1172
      %v1189 = vunpack.c.l.b16 %v1173
      %v1190 = vunpack.c.l.b16 %v1174
      %v1191 = vunpack.c.l.b16 %v1175
      %v1192 = vpack.c.b16 %v1185, %v1184
      %v1193 = vpack.c.b16 %v1187, %v1186
      %v1194 = vpack.c.b16 %v1189, %v1188
      %v1195 = vpack.c.b16 %v1191, %v1190
      %v1201 = vsel %vm425, %v1148, 0
      %v1204 = vsel %vm425, %v1149, 0
      %v1207 = vsel %vm425, %v1150, 0
      %1209 = vmatprep.subr.bf16.mxu0 0
      %1210 = vmatpush1.bf16.msra.mxu0 %v1192
      %1211 = vmatprep.subr.bf16.mxu0 0
      %1212 = vmatpush1.bf16.msra.mxu0 %v1193
      %1213 = vmatprep.subr.bf16.mxu0 0
      %1214 = vmatpush1.bf16.msra.mxu0 %v1194
      %1215 = vmatprep.subr.bf16.mxu0 0
      %1216 = vmatpush1.bf16.msra.mxu0 %v1195
      %1217 = vmatprep.subr.bf16.mxu0 0
      %1218 = vmatpush1.bf16.msra.mxu0 0
      %1219 = vmatprep.subr.bf16.mxu0 0
      %1220 = vmatpush1.bf16.msra.mxu0 0
      %1221 = vmatprep.subr.bf16.mxu0 0
      %1222 = vmatpush1.bf16.msra.mxu0 0
      %1223 = vmatprep.subr.bf16.mxu0 0
      %1224 = vmatpush1.bf16.msra.mxu0 0
      %1225 = vmatprep.subr.bf16.mxu0 0
      %1226 = vmatpush1.bf16.msra.mxu0 0
      %1227 = vmatprep.subr.bf16.mxu0 0
      %1228 = vmatpush1.bf16.msra.mxu0 0
      %1229 = vmatprep.subr.bf16.mxu0 0
      %1230 = vmatpush1.bf16.msra.mxu0 0
      %1231 = vmatprep.subr.bf16.mxu0 0
      %1232 = vmatpush1.bf16.msra.mxu0 0
      %1233 = vmatprep.subr.bf16.mxu0 0
      %1234 = vmatpush1.bf16.msra.mxu0 0
      %1235 = vmatprep.subr.bf16.mxu0 0
      %1236 = vmatpush1.bf16.msra.mxu0 0
      %1237 = vmatprep.subr.bf16.mxu0 0
      %1238 = vmatpush1.bf16.msra.mxu0 0
      %1239 = vmatprep.subr.bf16.mxu0 0
      %1240 = vmatpush1.bf16.msra.mxu0 0
      %1241 = vmatprep.mubr.bf16.mxu0 0
      %1242 = vmatmul.mubr.bf16.gmra.mrb[0].mxu0 %v1201
      %v1243 = vpop.f32.mrb[0].mxu0
      %v1244 = vadd.f32 0.0, %v1243
      %v1245 = vpop.f32.mrb[0].mxu0
      %v1246 = vpop.f32.mrb[0].mxu0
      %v1247 = vadd.f32 0.0, %v1246
      %v1248 = vpop.f32.mrb[0].mxu0
      %1249 = vmatprep.mubr.bf16.mxu0 0
      %1250 = vmatmul.mubr.bf16.gmra.mrb[0].mxu0 %v1204
      %v1251 = vpop.f32.mrb[0].mxu0
      %v1252 = vadd.f32 0.0, %v1251
      %v1253 = vpop.f32.mrb[0].mxu0
      %v1254 = vpop.f32.mrb[0].mxu0
      %v1255 = vadd.f32 0.0, %v1254
      %v1256 = vpop.f32.mrb[0].mxu0
      %1257 = vmatprep.mubr.bf16.mxu0 0
      %1258 = vmatmul.mubr.bf16.gmra.mrb[0].mxu0 %v1207
      %v1259 = vpop.f32.mrb[0].mxu0
      %v1260 = vadd.f32 0.0, %v1259
      %v1261 = vpop.f32.mrb[0].mxu0
      %v1262 = vpop.f32.mrb[0].mxu0
      %v1263 = vpop.f32.mrb[0].mxu0
      %1264 = vdwg.mxu0
      %v1273 = vunpack.c.l.b16 %v1159
      %v1274 = vunpack.c.l.b16 %v1160
      %v1275 = vunpack.c.l.b16 %v1161
      %v1276 = vunpack.c.l.b16 %v1162
      %v1277 = vunpack.c.l.b16 %v1163
      %v1278 = vunpack.c.l.b16 %v1164
      %v1279 = vunpack.c.l.b16 %v1165
      %v1280 = vunpack.c.l.b16 %v1166
      %v1281 = vpack.c.b16 %v1274, %v1273
      %v1282 = vpack.c.b16 %v1276, %v1275
      %v1283 = vpack.c.b16 %v1278, %v1277
      %v1284 = vpack.c.b16 %v1280, %v1279
      %v1290 = vsel %vm425, %v1140, 0
      %v1293 = vsel %vm425, %v1141, 0
      %v1296 = vsel %vm425, %v1142, 0
      %1298 = vmatprep.subr.bf16.mxu0 0
      %1299 = vmatpush1.bf16.msra.mxu0 %v1281
      %1300 = vmatprep.subr.bf16.mxu0 0
      %1301 = vmatpush1.bf16.msra.mxu0 %v1282
      %1302 = vmatprep.subr.bf16.mxu0 0
      %1303 = vmatpush1.bf16.msra.mxu0 %v1283
      %1304 = vmatprep.subr.bf16.mxu0 0
      %1305 = vmatpush1.bf16.msra.mxu0 %v1284
      %1306 = vmatprep.subr.bf16.mxu0 0
      %1307 = vmatpush1.bf16.msra.mxu0 0
      %1308 = vmatprep.subr.bf16.mxu0 0
      %1309 = vmatpush1.bf16.msra.mxu0 0
      %1310 = vmatprep.subr.bf16.mxu0 0
      %1311 = vmatpush1.bf16.msra.mxu0 0
      %1312 = vmatprep.subr.bf16.mxu0 0
      %1313 = vmatpush1.bf16.msra.mxu0 0
      %1314 = vmatprep.subr.bf16.mxu0 0
      %1315 = vmatpush1.bf16.msra.mxu0 0
      %1316 = vmatprep.subr.bf16.mxu0 0
      %1317 = vmatpush1.bf16.msra.mxu0 0
      %1318 = vmatprep.subr.bf16.mxu0 0
      %1319 = vmatpush1.bf16.msra.mxu0 0
      %1320 = vmatprep.subr.bf16.mxu0 0
      %1321 = vmatpush1.bf16.msra.mxu0 0
      %1322 = vmatprep.subr.bf16.mxu0 0
      %1323 = vmatpush1.bf16.msra.mxu0 0
      %1324 = vmatprep.subr.bf16.mxu0 0
      %1325 = vmatpush1.bf16.msra.mxu0 0
      %1326 = vmatprep.subr.bf16.mxu0 0
      %1327 = vmatpush1.bf16.msra.mxu0 0
      %1328 = vmatprep.subr.bf16.mxu0 0
      %1329 = vmatpush1.bf16.msra.mxu0 0
      %1330 = vmatprep.mubr.bf16.mxu0 0
      %1331 = vmatmul.mubr.bf16.gmra.mrb[0].mxu0 %v1290
      %v1332 = vpop.f32.mrb[0].mxu0
      %v1333 = vadd.f32 %v1244, %v1332
      %v1334 = vpop.f32.mrb[0].mxu0
      %v1335 = vpop.f32.mrb[0].mxu0
      %v1336 = vadd.f32 %v1247, %v1335
      %v1337 = vpop.f32.mrb[0].mxu0
      %1338 = vmatprep.mubr.bf16.mxu0 0
      %1339 = vmatmul.mubr.bf16.gmra.mrb[0].mxu0 %v1293
      %v1340 = vpop.f32.mrb[0].mxu0
      %v1341 = vadd.f32 %v1252, %v1340
      %v1342 = vpop.f32.mrb[0].mxu0
      %v1343 = vpop.f32.mrb[0].mxu0
      %v1344 = vadd.f32 %v1255, %v1343
      %v1345 = vpop.f32.mrb[0].mxu0
      %1346 = vmatprep.mubr.bf16.mxu0 0
      %1347 = vmatmul.mubr.bf16.gmra.mrb[0].mxu0 %v1296
      %v1348 = vpop.f32.mrb[0].mxu0
      %v1349 = vadd.f32 %v1260, %v1348
      %v1350 = vpop.f32.mrb[0].mxu0
      %v1351 = vpop.f32.mrb[0].mxu0
      %v1352 = vpop.f32.mrb[0].mxu0
      %1353 = vdwg.mxu0
      %s1354 = scalar_lea.vmem %s6, 64
      %v1355 = vld [vmem:[%s1354] sm:$0xf]
      %v1356 = vld [vmem:[%s1354 + $0x4] sm:$0xf]
      %v1357 = vld [vmem:[%s1354 + $0x8] sm:$0xf]
      %v1358 = vld [vmem:[%s1354 + $0xc] sm:$0xf]
      %v1359 = vld [vmem:[%s1354 + $0x10] sm:$0xf]
      %v1360 = vld [vmem:[%s1354 + $0x14] sm:$0xf]
      %v1361 = vld [vmem:[%s1354 + $0x18] sm:$0xf]
      %v1362 = vld [vmem:[%s1354 + $0x1c] sm:$0xf]
      %v1371 = vunpack.c.l.b16 %v1355
      %v1372 = vunpack.c.l.b16 %v1356
      %v1373 = vunpack.c.l.b16 %v1357
      %v1374 = vunpack.c.l.b16 %v1358
      %v1375 = vunpack.c.l.b16 %v1359
      %v1376 = vunpack.c.l.b16 %v1360
      %v1377 = vunpack.c.l.b16 %v1361
      %v1378 = vunpack.c.l.b16 %v1362
      %v1379 = vpack.c.b16 %v1372, %v1371
      %v1380 = vpack.c.b16 %v1374, %v1373
      %v1381 = vpack.c.b16 %v1376, %v1375
      %v1382 = vpack.c.b16 %v1378, %v1377
      %v1388 = vsel %vm425, %v1156, 0
      %v1391 = vsel %vm425, %v1157, 0
      %v1394 = vsel %vm425, %v1158, 0
      %1396 = vmatprep.subr.bf16.mxu0 0
      %1397 = vmatpush1.bf16.msra.mxu0 %v1379
      %1398 = vmatprep.subr.bf16.mxu0 0
      %1399 = vmatpush1.bf16.msra.mxu0 %v1380
      %1400 = vmatprep.subr.bf16.mxu0 0
      %1401 = vmatpush1.bf16.msra.mxu0 %v1381
      %1402 = vmatprep.subr.bf16.mxu0 0
      %1403 = vmatpush1.bf16.msra.mxu0 %v1382
      %1404 = vmatprep.subr.bf16.mxu0 0
      %1405 = vmatpush1.bf16.msra.mxu0 0
      %1406 = vmatprep.subr.bf16.mxu0 0
      %1407 = vmatpush1.bf16.msra.mxu0 0
      %1408 = vmatprep.subr.bf16.mxu0 0
      %1409 = vmatpush1.bf16.msra.mxu0 0
      %1410 = vmatprep.subr.bf16.mxu0 0
      %1411 = vmatpush1.bf16.msra.mxu0 0
      %1412 = vmatprep.subr.bf16.mxu0 0
      %1413 = vmatpush1.bf16.msra.mxu0 0
      %1414 = vmatprep.subr.bf16.mxu0 0
      %1415 = vmatpush1.bf16.msra.mxu0 0
      %1416 = vmatprep.subr.bf16.mxu0 0
      %1417 = vmatpush1.bf16.msra.mxu0 0
      %1418 = vmatprep.subr.bf16.mxu0 0
      %1419 = vmatpush1.bf16.msra.mxu0 0
      %1420 = vmatprep.subr.bf16.mxu0 0
      %1421 = vmatpush1.bf16.msra.mxu0 0
      %1422 = vmatprep.subr.bf16.mxu0 0
      %1423 = vmatpush1.bf16.msra.mxu0 0
      %1424 = vmatprep.subr.bf16.mxu0 0
      %1425 = vmatpush1.bf16.msra.mxu0 0
      %1426 = vmatprep.subr.bf16.mxu0 0
      %1427 = vmatpush1.bf16.msra.mxu0 0
      %1428 = vmatprep.mubr.bf16.mxu0 0
      %1429 = vmatmul.mubr.bf16.gmra.mrb[0].mxu0 %v1388
      %v1430 = vpop.f32.mrb[0].mxu0
      %v1431 = vadd.f32 0.0, %v1430
      %v1432 = vpop.f32.mrb[0].mxu0
      %v1433 = vpop.f32.mrb[0].mxu0
      %v1434 = vadd.f32 0.0, %v1433
      %v1435 = vpop.f32.mrb[0].mxu0
      %1436 = vmatprep.mubr.bf16.mxu0 0
      %1437 = vmatmul.mubr.bf16.gmra.mrb[0].mxu0 %v1391
      %v1438 = vpop.f32.mrb[0].mxu0
      %v1439 = vadd.f32 0.0, %v1438
      %v1440 = vpop.f32.mrb[0].mxu0
      %v1441 = vpop.f32.mrb[0].mxu0
      %v1442 = vadd.f32 0.0, %v1441
      %v1443 = vpop.f32.mrb[0].mxu0
      %1444 = vmatprep.mubr.bf16.mxu0 0
      %1445 = vmatmul.mubr.bf16.gmra.mrb[0].mxu0 %v1394
      %v1446 = vpop.f32.mrb[0].mxu0
      %v1447 = vadd.f32 0.0, %v1446
      %v1448 = vpop.f32.mrb[0].mxu0
      %v1449 = vpop.f32.mrb[0].mxu0
      %v1450 = vpop.f32.mrb[0].mxu0
      %1451 = vdwg.mxu0
      %v1452 = vadd.f32 %v1333, %v1431
      %v1453 = vadd.f32 %v1336, %v1434
      %v1454 = vadd.f32 %v1341, %v1439
      %v1455 = vadd.f32 %v1344, %v1442
      %v1456 = vadd.f32 %v1349, %v1447
      %v1457 = vld [vmem:[%s7] sm:$0x1]
      %v1459 = vlaneseq
      %v1460 = vshrl.u32 %v1459, 7
      %v1461 = vsub.s32 0, %v1460
      %v1462 = vrot.slane %v1457, %v1461
      %v1464 = vadd.f32 %v1452, %v1462
      %v1465 = vadd.f32 %v1453, %v1462
      %v1466 = vadd.f32 %v1454, %v1462
      %v1467 = vadd.f32 %v1455, %v1462
      %v1468 = vadd.f32 %v1456, %v1462
      %v1469 = vmax.f32 %v1464, 0.0
      %v1470 = vmax.f32 %v1465, 0.0
      %v1471 = vmax.f32 %v1466, 0.0
      %v1472 = vmax.f32 %v1467, 0.0
      %v1473 = vmax.f32 %v1468, 0.0
      %v1474 = vadd.f32 %v1125, %v1469
      %v1475 = vadd.f32 %v1126, %v1470
      %v1476 = vadd.f32 %v1127, %v1471
      %v1477 = vadd.f32 %v1128, %v1472
      %v1478 = vadd.f32 %v1129, %v1473
      %vm1482 = vcmask 1046528
      %v1483 = vrot.slane %v1476, 1
      %v1484 = vrot.slane %v1477, 1
      %v1485 = vsel %vm1482, %v1483, %v1484
      %v1486 = vrot.slane %v1478, 1
      %v1487 = vsel %vm1482, %v1484, %v1486
      %v1490 = vsub.f32 %v1474, %v1485
      %v1491 = vsub.f32 %v1475, %v1487
      %v1492 = vand.u32 2147483647, %v1490
      %v1493 = vand.u32 2147483647, %v1491
      %v1494 = vpack.c.bf16 %v1493, %v1492
      %v1495 = vld [vmem:[%s8] sm:$0xf]
      %v1496 = vld [vmem:[%s8 + $0x4] sm:$0xf]
      %v1497 = vld [vmem:[%s8 + $0x8] sm:$0xf]
      %v1498 = vld [vmem:[%s8 + $0xc] sm:$0xf]
      %v1499 = vld [vmem:[%s8 + $0x10] sm:$0xf]
      %v1500 = vld [vmem:[%s8 + $0x14] sm:$0xf]
      %v1501 = vld [vmem:[%s8 + $0x18] sm:$0xf]
      %v1502 = vld [vmem:[%s8 + $0x1c] sm:$0xf]
      %v1511 = vunpack.c.l.b16 %v1495
      %v1512 = vunpack.c.l.b16 %v1496
      %v1513 = vunpack.c.l.b16 %v1497
      %v1514 = vunpack.c.l.b16 %v1498
      %v1515 = vunpack.c.l.b16 %v1499
      %v1516 = vunpack.c.l.b16 %v1500
      %v1517 = vunpack.c.l.b16 %v1501
      %v1518 = vunpack.c.l.b16 %v1502
      %v1519 = vpack.c.b16 %v1512, %v1511
      %v1520 = vpack.c.b16 %v1514, %v1513
      %v1521 = vpack.c.b16 %v1516, %v1515
      %v1522 = vpack.c.b16 %v1518, %v1517
      %v1528 = vsel %vm425, %v1494, 0
      %1530 = vmatprep.subr.bf16.mxu0 0
      %1531 = vmatpush1.bf16.msra.mxu0 %v1519
      %1532 = vmatprep.subr.bf16.mxu0 0
      %1533 = vmatpush1.bf16.msra.mxu0 %v1520
      %1534 = vmatprep.subr.bf16.mxu0 0
      %1535 = vmatpush1.bf16.msra.mxu0 %v1521
      %1536 = vmatprep.subr.bf16.mxu0 0
      %1537 = vmatpush1.bf16.msra.mxu0 %v1522
      %1538 = vmatprep.subr.bf16.mxu0 0
      %1539 = vmatpush1.bf16.msra.mxu0 0
      %1540 = vmatprep.subr.bf16.mxu0 0
      %1541 = vmatpush1.bf16.msra.mxu0 0
      %1542 = vmatprep.subr.bf16.mxu0 0
      %1543 = vmatpush1.bf16.msra.mxu0 0
      %1544 = vmatprep.subr.bf16.mxu0 0
      %1545 = vmatpush1.bf16.msra.mxu0 0
      %1546 = vmatprep.subr.bf16.mxu0 0
      %1547 = vmatpush1.bf16.msra.mxu0 0
      %1548 = vmatprep.subr.bf16.mxu0 0
      %1549 = vmatpush1.bf16.msra.mxu0 0
      %1550 = vmatprep.subr.bf16.mxu0 0
      %1551 = vmatpush1.bf16.msra.mxu0 0
      %1552 = vmatprep.subr.bf16.mxu0 0
      %1553 = vmatpush1.bf16.msra.mxu0 0
      %1554 = vmatprep.subr.bf16.mxu0 0
      %1555 = vmatpush1.bf16.msra.mxu0 0
      %1556 = vmatprep.subr.bf16.mxu0 0
      %1557 = vmatpush1.bf16.msra.mxu0 0
      %1558 = vmatprep.subr.bf16.mxu0 0
      %1559 = vmatpush1.bf16.msra.mxu0 0
      %1560 = vmatprep.subr.bf16.mxu0 0
      %1561 = vmatpush1.bf16.msra.mxu0 0
      %1562 = vmatprep.mubr.bf16.mxu0 0
      %1563 = vmatmul.mubr.bf16.gmra.mrb[0].mxu0 %v1528
      %v1564 = vpop.f32.mrb[0].mxu0
      %v1565 = vadd.f32 0.0, %v1564
      %v1566 = vpop.f32.mrb[0].mxu0
      %v1567 = vpop.f32.mrb[0].mxu0
      %v1568 = vadd.f32 0.0, %v1567
      %v1569 = vpop.f32.mrb[0].mxu0
      %1570 = vdwg.mxu0
      %1571 = vst [vmem:[%s417] sm:$0xff] %v1565
      %1572 = vst [vmem:[%s417 + $0x8] sm:$0xff] %v1568
      %v1573 = vadd.f32 %v1565, %v1568
      %v1574 = vrot.slane %v1573, 4
      %v1575 = vadd.f32 %v1573, %v1574
      %v1576 = vrot.slane %v1575, 2
      %v1577 = vadd.f32 %v1575, %v1576
      %v1578 = vrot.slane %v1577, 1
      %v1579 = vadd.f32 %v1577, %v1578
      %v1580 = vadd.f32 %v1579, 0.0
      %v1581 = vmul.f32 %v1565, %v1565
      %v1582 = vmul.f32 %v1568, %v1568
      %v1583 = vadd.f32 %v1581, %v1582
      %v1584 = vrot.slane %v1583, 4
      %v1585 = vadd.f32 %v1583, %v1584
      %v1586 = vrot.slane %v1585, 2
      %v1587 = vadd.f32 %v1585, %v1586
      %v1588 = vrot.slane %v1587, 1
      %v1589 = vadd.f32 %v1587, %v1588
      %v1590 = vadd.f32 %v1589, 0.0
      %1591 = vst [vmem:[%s420] sm:$0x1] %v1580
      %1592 = vst [vmem:[%s423] sm:$0x1] %v1590
      %p1593 = scmp.lt.s32.totalorder %s23, 1
      %s1594 = scalar_select %p1593, %s23, 1
      %s1595 = smul.addr %s1594, 2
      %s1596 = smul.addr %s1595, 8
      %s1597 = scalar_lea.vmem %s9, %s1596
      %p1598 = scmp.lt.s32.totalorder %s23, 1
      %s1599 = scalar_select %p1598, %s23, 1
      %s1600 = scalar_lea.vmem %s10, %s1599
      %p1601 = scmp.lt.s32.totalorder %s23, 1
      %s1602 = scalar_select %p1601, %s23, 1
      %s1603 = scalar_lea.vmem %s11, %s1602
      // Predicated region
      $region57: #{densecat_cat_diff_forward.2} parent=55 // pred_check
        %p1604 = pneg %p240
      $region58: #{densecat_cat_diff_forward.2} parent=55 // pred_check_branch
        %1606 = sbr.rel (%p1604) target = $region60
      $region59: #{densecat_cat_diff_forward.2} parent=55 // pred_region
        _
      $region60: #{densecat_cat_diff_forward.2} parent=55 // pred_fallthru
        _
      // Predicated region
      $region61: #{densecat_cat_diff_forward.2} parent=55 // pred_check
        %p1607 = pneg %p266
      $region62: #{densecat_cat_diff_forward.2} parent=55 // pred_check_branch
        %1609 = sbr.rel (%p1607) target = $region64
      $region63: #{densecat_cat_diff_forward.2} parent=55 // pred_region
        _
      $region64: #{densecat_cat_diff_forward.2} parent=55 // pred_fallthru
        _
      // Predicated region
      $region65: #{densecat_cat_diff_forward.2} parent=55 // pred_check
        %p1610 = pneg %p292
      $region66: #{densecat_cat_diff_forward.2} parent=55 // pred_check_branch
        %1612 = sbr.rel (%p1610) target = $region68
      $region67: #{densecat_cat_diff_forward.2} parent=55 // pred_region
        _
      $region68: #{densecat_cat_diff_forward.2} parent=55 // pred_fallthru
        _
    $region56: #{densecat_cat_diff_forward.2} parent=5 // pred_fallthru
      _
    %p1613 = scmp.le.s32.totalorder 2, %s18
    // Predicated region
    $region69: #{densecat_cat_diff_forward.2} parent=5 // pred_check
      %p1614 = pneg %p1613
    $region70: #{densecat_cat_diff_forward.2} parent=5 // pred_check_branch
      %1616 = sbr.rel (%p1614) target = $region72
    $region71: #{densecat_cat_diff_forward.2} parent=5 // pred_region
      %s1617 = ssub.s32 %s18, 2
      // Predicated region
      $region73: #{densecat_cat_diff_forward.2} parent=71 // pred_check
        %p1618 = pneg %p246
      $region74: #{densecat_cat_diff_forward.2} parent=71 // pred_check_branch
        %1620 = sbr.rel (%p1618) target = $region76
      $region75: #{densecat_cat_diff_forward.2} parent=71 // pred_region
        %p1621 = scmp.lt.s32.totalorder %s24, 1
        %s1622 = scalar_select %p1621, %s24, 1
        %s1623 = smul.addr %s1622, 2
        %s1624 = smul.addr %s1623, 8
        %s1625 = scalar_lea.vmem %s9, %s1624
      $region76: #{densecat_cat_diff_forward.2} parent=71 // pred_fallthru
        _
      // Predicated region
      $region77: #{densecat_cat_diff_forward.2} parent=71 // pred_check
        %p1626 = pneg %p272
      $region78: #{densecat_cat_diff_forward.2} parent=71 // pred_check_branch
        %1628 = sbr.rel (%p1626) target = $region80
      $region79: #{densecat_cat_diff_forward.2} parent=71 // pred_region
        %p1629 = scmp.lt.s32.totalorder %s24, 1
        %s1630 = scalar_select %p1629, %s24, 1
        %s1631 = scalar_lea.vmem %s10, %s1630
      $region80: #{densecat_cat_diff_forward.2} parent=71 // pred_fallthru
        _
      // Predicated region
      $region81: #{densecat_cat_diff_forward.2} parent=71 // pred_check
        %p1632 = pneg %p298
      $region82: #{densecat_cat_diff_forward.2} parent=71 // pred_check_branch
        %1634 = sbr.rel (%p1632) target = $region84
      $region83: #{densecat_cat_diff_forward.2} parent=71 // pred_region
        %p1635 = scmp.lt.s32.totalorder %s24, 1
        %s1636 = scalar_select %p1635, %s24, 1
        %s1637 = scalar_lea.vmem %s11, %s1636
      $region84: #{densecat_cat_diff_forward.2} parent=71 // pred_fallthru
        _
    $region72: #{densecat_cat_diff_forward.2} parent=5 // pred_fallthru
      _
  $region6: #{densecat_cat_diff_forward.2} parent=0 // loop_footer
    %s22 = sadd.s32 1, %s18
  $region7: #{densecat_cat_diff_forward.2} parent=0 // loop_footer_branch
    %17 = sbr.rel target = $region3
  $region8: #{densecat_cat_diff_forward.2} parent=0 // loop_exit
    _

</llo_original>
